<compile_context>
chip_gen: v7x
topology: tpu7x:2x2x1
jax: 0.10.0
libtpu: 0.0.40
codegen_flags: <defaults>
</compile_context>

<pallas_src>
import functools

import jax
import jax.numpy as jnp
from jax.experimental import pallas as pl
from jax.experimental.pallas import tpu as pltpu


def _accumulate(x_ref, sum_acc, max_acc, *, tn, c, acc_lanes, bn, c_blk,
                chunk_valid):
    """Streams the current (tn, C, t_hw) x block into the accumulators.

    chunk_valid[k] is the STATIC number of valid lanes in 128-lane chunk k:
    == acc_lanes  -> fully valid (no mask), == 0 -> skipped entirely,
    anything else -> partially valid (masked) tail chunk.
    Per (batch, channel) row block the chunk partials stay register-resident;
    each scratch accumulator is read-modified-written once per row block.
    """
    n_chunks = len(chunk_valid)
    for b0 in range(0, tn, bn):
        b1 = min(b0 + bn, tn)
        for c0 in range(0, c, c_blk):
            c1 = min(c0 + c_blk, c)
            ps = None
            pm = None
            for k in range(n_chunks):
                v = chunk_valid[k]
                if v == 0:
                    continue  # chunk is entirely past the end of HW
                xs = x_ref[b0:b1, c0:c1,
                           k * acc_lanes:(k + 1) * acc_lanes].astype(jnp.float32)
                if v < acc_lanes:
                    lane_idx = jax.lax.broadcasted_iota(
                        jnp.int32, (1, 1, acc_lanes), 2)
                    valid = lane_idx < v
                    xs_s = jnp.where(valid, xs, 0.0)
                    xs_m = jnp.where(valid, xs, -jnp.inf)
                else:
                    xs_s = xs
                    xs_m = xs
                ps = xs_s if ps is None else ps + xs_s
                pm = xs_m if pm is None else jnp.maximum(pm, xs_m)
            if ps is not None:
                sum_acc[b0:b1, c0:c1, :] += ps
                max_acc[b0:b1, c0:c1, :] = jnp.maximum(
                    max_acc[b0:b1, c0:c1, :], pm)


def _channel_attention_kernel(x_ref, w1t_ref, w2t_ref, o_ref, sum_acc, max_acc,
                              *, tn, c, t_hw, hw_total, acc_lanes, bn, c_blk,
                              n_hw_tiles, need_mask):
    # x_ref:   (tn, C, t_hw)  native dtype
    # w1t_ref: (C, C//r)      f32   (fc1 weight, transposed)
    # w2t_ref: (C//r, C)      f32   (fc2 weight, transposed)
    # o_ref:   (tn, 1, C)     output block (written only on the last HW step)
    # sum_acc, max_acc: (tn, C, acc_lanes) f32 scratch (lane-wide partials)
    hw_i = pl.program_id(1)

    @pl.when(hw_i == 0)
    def _init():
        sum_acc[...] = jnp.zeros_like(sum_acc)
        max_acc[...] = jnp.full(max_acc.shape, -jnp.inf, dtype=max_acc.dtype)

    n_chunks = t_hw // acc_lanes
    full_valid = (acc_lanes,) * n_chunks
    acc = functools.partial(_accumulate, x_ref, sum_acc, max_acc,
                            tn=tn, c=c, acc_lanes=acc_lanes, bn=bn, c_blk=c_blk)

    if need_mask:
        # Only the last HW tile is masked; all full tiles take the cheap
        # unmasked add/max path.  `rem` and the per-chunk validity are static.
        rem = hw_total - (n_hw_tiles - 1) * t_hw
        tail_valid = tuple(
            max(0, min(acc_lanes, rem - k * acc_lanes)) for k in range(n_chunks))

        @pl.when(hw_i < n_hw_tiles - 1)
        def _full_tiles():
            acc(chunk_valid=full_valid)

        @pl.when(hw_i == n_hw_tiles - 1)
        def _tail_tile():
            acc(chunk_valid=tail_valid)
    else:
        acc(chunk_valid=full_valid)

    @pl.when(hw_i == n_hw_tiles - 1)
    def _finalize():
        # Single cross-lane (XLU) reduce per batch tile, then the fused MLP.
        inv_hw = 1.0 / float(hw_total)
        avg = jnp.sum(sum_acc[...], axis=-1) * inv_hw         # (tn, C)
        mx = jnp.max(max_acc[...], axis=-1)                   # (tn, C)

        # Fused MLP for both pooled statistics (2 matmuls instead of 4).
        # NOTE: when tn does not divide N, the padded batch rows contain
        # garbage, but every op below is row-independent and the partial
        # output-block write discards those rows.
        stacked = jnp.concatenate([avg, mx], axis=0)           # (2*tn, C)
        h = jnp.dot(stacked, w1t_ref[...],
                    preferred_element_type=jnp.float32,
                    precision=jax.lax.Precision.HIGHEST)       # (2*tn, C//r)
        h = jnp.maximum(h, 0.0)                                # ReLU
        h2 = h[:tn] + h[tn:]                                   # (tn, C//r)
        out = jnp.dot(h2, w2t_ref[...],
                      preferred_element_type=jnp.float32,
                      precision=jax.lax.Precision.HIGHEST)     # (tn, C)
        o_ref[...] = jax.nn.sigmoid(out).reshape(tn, 1, c).astype(o_ref.dtype)


def channel_attention(x_nchw, w_fc1, w_fc2):
    """x_nchw: (N, C, H, W); w_fc1: (C//r, C, 1, 1); w_fc2: (C, C//r, 1, 1).

    Returns (N, C, 1, 1) attention weights, matching the PyTorch module.
    """
    n, c, h, w = x_nchw.shape
    hidden = w_fc1.shape[0]
    hw = h * w

    # Keep x in its native dtype (no wrapper-side upcast); weights in f32.
    x_flat = x_nchw.reshape(n, c, hw)
    w1t = w_fc1.reshape(hidden, c).T.astype(jnp.float32)   # (C, hidden)
    w2t = w_fc2.reshape(c, hidden).T.astype(jnp.float32)   # (hidden, C)

    lane = 128
    itemsize = jnp.dtype(x_flat.dtype).itemsize

    # --- HW tile: multiple of 128 lanes (full HW when HW < 128), capped so a
    # single batch row's x slab stays ~<= 2 MiB.  This keeps double-buffered
    # x + scratch well under the scoped-VMEM limit on every generation,
    # including v7x's 64 MiB physical VMEM. ---
    row_budget_bytes = 2 * 1024 * 1024
    if hw <= lane:
        t_hw = hw
    else:
        t_hw = (hw // lane) * lane
        budget_lanes = max(lane,
                           (row_budget_bytes // (c * itemsize)) // lane * lane)
        t_hw = min(t_hw, budget_lanes, 2048)
    acc_lanes = min(t_hw, lane)
    need_mask = (hw % t_hw) != 0
    grid_hw = pl.cdiv(hw, t_hw)

    # -inf max-padding of the tail tile is only safe because every lane
    # position receives at least one valid element from a full tile.
    assert (not need_mask) or (grid_hw >= 2 and t_hw >= lane)

    # --- Batch tile: grow while double-buffered x + f32 scratch fits a
    # conservative budget; cap at 8 rows (bounds vreg pressure of the
    # in-register chunk partials) and keep grid_n >= 2 whenever N >= 2 so the
    # "parallel" batch axis can be split across TensorCores (v7x megacore). ---
    block_row_bytes = c * t_hw * itemsize
    scratch_row_bytes = 2 * c * acc_lanes * 4
    vmem_budget = 12 * 1024 * 1024
    tn = 1
    while tn < min(n, 8):
        nxt = tn * 2
        if 2 * nxt * block_row_bytes + nxt * scratch_row_bytes > vmem_budget:
            break
        tn = nxt
    tn = min(tn, n)
    if n >= 2:
        tn = min(tn, max(1, n // 2))
    grid_n = pl.cdiv(n, tn)

    # Row blocking for the accumulation loop: a native-dtype vreg worth of
    # channels per slice (8 rows f32, 16 rows bf16, ...) and a few batch rows
    # so sum/max chunk partials stay register-resident.
    c_blk = min(c, 8 * max(1, 4 // itemsize))
    bn = max(1, min(tn, 32 // c_blk))

    kernel = functools.partial(
        _channel_attention_kernel,
        tn=tn, c=c, t_hw=t_hw, hw_total=hw, acc_lanes=acc_lanes,
        bn=bn, c_blk=c_blk, n_hw_tiles=grid_hw, need_mask=need_mask)

    cost = pl.CostEstimate(
        flops=2 * n * c * hw + 2 * (2 * n) * c * hidden + 2 * n * hidden * c,
        transcendentals=n * c,
        bytes_accessed=(x_flat.size * itemsize
                        + (w1t.size + w2t.size) * 4
                        + n * c * itemsize),
    )

    out = pl.pallas_call(
        kernel,
        out_shape=jax.ShapeDtypeStruct((n, 1, c), x_nchw.dtype),
        grid_spec=pltpu.PrefetchScalarGridSpec(
            num_scalar_prefetch=0,
            grid=(grid_n, grid_hw),
            in_specs=[
                pl.BlockSpec((tn, c, t_hw), lambda ni, hwi: (ni, 0, hwi)),
                pl.BlockSpec((c, hidden), lambda ni, hwi: (0, 0)),
                pl.BlockSpec((hidden, c), lambda ni, hwi: (0, 0)),
            ],
            out_specs=pl.BlockSpec((tn, 1, c), lambda ni, hwi: (ni, 0, 0)),
            scratch_shapes=[
                pltpu.VMEM((tn, c, acc_lanes), jnp.float32),
                pltpu.VMEM((tn, c, acc_lanes), jnp.float32),
            ],
        ),
        compiler_params=pltpu.CompilerParams(
            dimension_semantics=("parallel", "arbitrary"),
            vmem_limit_bytes=32 * 1024 * 1024,
        ),
        cost_estimate=cost,
    )(x_flat, w1t, w2t)

    return out.reshape(n, c, 1, 1)


def _reference(x_nchw, w_fc1, w_fc2):
    # Pure-JAX reference for sanity checking.
    n, c, h, w = x_nchw.shape
    hidden = w_fc1.shape[0]
    w1 = w_fc1.reshape(hidden, c).astype(jnp.float32)
    w2 = w_fc2.reshape(c, hidden).astype(jnp.float32)
    xf = x_nchw.astype(jnp.float32)
    avg = jnp.mean(xf, axis=(2, 3))
    mx = jnp.max(xf, axis=(2, 3))

    def mlp(v):
        return jnp.maximum(v @ w1.T, 0.0) @ w2.T

    return jax.nn.sigmoid(mlp(avg) + mlp(mx)).reshape(n, c, 1, 1)


if __name__ == "__main__":
    # Small but valid shapes: in_planes must be divisible by ratio=16.
    N, C, H, W = 2, 64, 16, 16
    RATIO = 16
    HIDDEN = C // RATIO

    key = jax.random.PRNGKey(0)
    kx, k1, k2 = jax.random.split(key, 3)

    x = jax.random.normal(kx, (N, C, H, W), dtype=jnp.float32)
    # Deterministic synthetic weights (shapes match nn.Conv2d(in, out, 1, bias=False)).
    w_fc1 = 0.1 * jax.random.normal(k1, (HIDDEN, C, 1, 1), dtype=jnp.float32)
    w_fc2 = 0.1 * jax.random.normal(k2, (C, HIDDEN, 1, 1), dtype=jnp.float32)

    out = channel_attention(x, w_fc1, w_fc2)
    out = jax.block_until_ready(out)

    ref = _reference(x, w_fc1, w_fc2)
    assert out.shape == (N, C, 1, 1), out.shape
    assert jnp.allclose(out.astype(jnp.float32), ref, atol=1e-5, rtol=1e-5), \
        "mismatch vs reference"

    print("KERNEL_OK")
</pallas_src>

<mosaic_0001>
module attributes {stable_mosaic.version = 11 : i64} {
  func.func @_channel_attention_kernel(%arg0: i32, %arg1: i32, %arg2: memref<1x64x256xf32, #tpu.memory_space<vmem>>, %arg3: memref<64x4xf32, #tpu.memory_space<vmem>>, %arg4: memref<4x64xf32, #tpu.memory_space<vmem>>, %arg5: memref<1x1x64xf32, #tpu.memory_space<vmem>>, %arg6: memref<1x64x128xf32, #tpu.memory_space<vmem>>, %arg7: memref<1x64x128xf32, #tpu.memory_space<vmem>>) attributes {dimension_semantics = [#tpu.dimension_semantics<parallel>, #tpu.dimension_semantics<arbitrary>], iteration_bounds = array<i64: 2, 1>, scalar_prefetch = 0 : i64, scratch_operands = 2 : i64, tpu.core_type = #tpu.core_type<tc>, window_params = [{transform_indices = @transform_0, window_bounds = array<i64: 1, 64, 256>}, {pipeline_mode = #tpu.pipeline_mode<synchronous>, transform_indices = @transform_1, window_bounds = array<i64: 64, 4>}, {pipeline_mode = #tpu.pipeline_mode<synchronous>, transform_indices = @transform_2, window_bounds = array<i64: 4, 64>}, {transform_indices = @transform_3, window_bounds = array<i64: 1, 1, 64>}]} {
    %c0_i32 = arith.constant 0 : i32
    %0 = arith.cmpi eq, %arg1, %c0_i32 : i32
    %1 = arith.extui %0 : i1 to i32
    %c0_i32_0 = arith.constant 0 : i32
    %2 = arith.cmpi ne, %1, %c0_i32_0 : i32
    scf.if %2 {
      %cst = arith.constant 0.000000e+00 : f32
      %86 = vector.broadcast %cst : f32 to vector<1x64x128xf32>
      %c0_138 = arith.constant 0 : index
      %c0_139 = arith.constant 0 : index
      %c0_140 = arith.constant 0 : index
      %87 = vector.load %arg6[%c0_138, %c0_139, %c0_140] : memref<1x64x128xf32, #tpu.memory_space<vmem>>, vector<1x64x128xf32>
      tpu.vector_store %arg6[%c0_138, %c0_139, %c0_140], %86 {strides = array<i32>} : memref<1x64x128xf32, #tpu.memory_space<vmem>>, vector<1x64x128xf32>,
      %cst_141 = arith.constant 0xFF800000 : f32
      %88 = vector.broadcast %cst_141 : f32 to vector<1x64x128xf32>
      %c0_142 = arith.constant 0 : index
      %c0_143 = arith.constant 0 : index
      %c0_144 = arith.constant 0 : index
      %89 = vector.load %arg7[%c0_142, %c0_143, %c0_144] : memref<1x64x128xf32, #tpu.memory_space<vmem>>, vector<1x64x128xf32>
      tpu.vector_store %arg7[%c0_142, %c0_143, %c0_144], %88 {strides = array<i32>} : memref<1x64x128xf32, #tpu.memory_space<vmem>>, vector<1x64x128xf32>,
    } else {
    }
    %c0 = arith.constant 0 : index
    %c0_1 = arith.constant 0 : index
    %c0_2 = arith.constant 0 : index
    %3 = vector.load %arg2[%c0, %c0_1, %c0_2] : memref<1x64x256xf32, #tpu.memory_space<vmem>>, vector<1x8x128xf32>
    %c0_3 = arith.constant 0 : index
    %c0_4 = arith.constant 0 : index
    %c128 = arith.constant 128 : index
    %4 = vector.load %arg2[%c0_3, %c0_4, %c128] : memref<1x64x256xf32, #tpu.memory_space<vmem>>, vector<1x8x128xf32>
    %5 = arith.addf %3, %4 : vector<1x8x128xf32>
    %6 = arith.maximumf %3, %4 : vector<1x8x128xf32>
    %c0_5 = arith.constant 0 : index
    %c0_6 = arith.constant 0 : index
    %c0_7 = arith.constant 0 : index
    %7 = vector.load %arg6[%c0_5, %c0_6, %c0_7] : memref<1x64x128xf32, #tpu.memory_space<vmem>>, vector<1x8x128xf32>
    %8 = arith.addf %7, %5 : vector<1x8x128xf32>
    %c0_8 = arith.constant 0 : index
    %c0_9 = arith.constant 0 : index
    %c0_10 = arith.constant 0 : index
    %9 = vector.load %arg6[%c0_8, %c0_9, %c0_10] : memref<1x64x128xf32, #tpu.memory_space<vmem>>, vector<1x8x128xf32>
    tpu.vector_store %arg6[%c0_8, %c0_9, %c0_10], %8 {strides = array<i32>} : memref<1x64x128xf32, #tpu.memory_space<vmem>>, vector<1x8x128xf32>,
    %c0_11 = arith.constant 0 : index
    %c0_12 = arith.constant 0 : index
    %c0_13 = arith.constant 0 : index
    %10 = vector.load %arg7[%c0_11, %c0_12, %c0_13] : memref<1x64x128xf32, #tpu.memory_space<vmem>>, vector<1x8x128xf32>
    %11 = arith.maximumf %10, %6 : vector<1x8x128xf32>
    %c0_14 = arith.constant 0 : index
    %c0_15 = arith.constant 0 : index
    %c0_16 = arith.constant 0 : index
    %12 = vector.load %arg7[%c0_14, %c0_15, %c0_16] : memref<1x64x128xf32, #tpu.memory_space<vmem>>, vector<1x8x128xf32>
    tpu.vector_store %arg7[%c0_14, %c0_15, %c0_16], %11 {strides = array<i32>} : memref<1x64x128xf32, #tpu.memory_space<vmem>>, vector<1x8x128xf32>,
    %c0_17 = arith.constant 0 : index
    %c8 = arith.constant 8 : index
    %c0_18 = arith.constant 0 : index
    %13 = vector.load %arg2[%c0_17, %c8, %c0_18] : memref<1x64x256xf32, #tpu.memory_space<vmem>>, vector<1x8x128xf32>
    %c0_19 = arith.constant 0 : index
    %c8_20 = arith.constant 8 : index
    %c128_21 = arith.constant 128 : index
    %14 = vector.load %arg2[%c0_19, %c8_20, %c128_21] : memref<1x64x256xf32, #tpu.memory_space<vmem>>, vector<1x8x128xf32>
    %15 = arith.addf %13, %14 : vector<1x8x128xf32>
    %16 = arith.maximumf %13, %14 : vector<1x8x128xf32>
    %c0_22 = arith.constant 0 : index
    %c8_23 = arith.constant 8 : index
    %c0_24 = arith.constant 0 : index
    %17 = vector.load %arg6[%c0_22, %c8_23, %c0_24] : memref<1x64x128xf32, #tpu.memory_space<vmem>>, vector<1x8x128xf32>
    %18 = arith.addf %17, %15 : vector<1x8x128xf32>
    %c0_25 = arith.constant 0 : index
    %c8_26 = arith.constant 8 : index
    %c0_27 = arith.constant 0 : index
    %19 = vector.load %arg6[%c0_25, %c8_26, %c0_27] : memref<1x64x128xf32, #tpu.memory_space<vmem>>, vector<1x8x128xf32>
    tpu.vector_store %arg6[%c0_25, %c8_26, %c0_27], %18 {strides = array<i32>} : memref<1x64x128xf32, #tpu.memory_space<vmem>>, vector<1x8x128xf32>,
    %c0_28 = arith.constant 0 : index
    %c8_29 = arith.constant 8 : index
    %c0_30 = arith.constant 0 : index
    %20 = vector.load %arg7[%c0_28, %c8_29, %c0_30] : memref<1x64x128xf32, #tpu.memory_space<vmem>>, vector<1x8x128xf32>
    %21 = arith.maximumf %20, %16 : vector<1x8x128xf32>
    %c0_31 = arith.constant 0 : index
    %c8_32 = arith.constant 8 : index
    %c0_33 = arith.constant 0 : index
    %22 = vector.load %arg7[%c0_31, %c8_32, %c0_33] : memref<1x64x128xf32, #tpu.memory_space<vmem>>, vector<1x8x128xf32>
    tpu.vector_store %arg7[%c0_31, %c8_32, %c0_33], %21 {strides = array<i32>} : memref<1x64x128xf32, #tpu.memory_space<vmem>>, vector<1x8x128xf32>,
    %c0_34 = arith.constant 0 : index
    %c16 = arith.constant 16 : index
    %c0_35 = arith.constant 0 : index
    %23 = vector.load %arg2[%c0_34, %c16, %c0_35] : memref<1x64x256xf32, #tpu.memory_space<vmem>>, vector<1x8x128xf32>
    %c0_36 = arith.constant 0 : index
    %c16_37 = arith.constant 16 : index
    %c128_38 = arith.constant 128 : index
    %24 = vector.load %arg2[%c0_36, %c16_37, %c128_38] : memref<1x64x256xf32, #tpu.memory_space<vmem>>, vector<1x8x128xf32>
    %25 = arith.addf %23, %24 : vector<1x8x128xf32>
    %26 = arith.maximumf %23, %24 : vector<1x8x128xf32>
    %c0_39 = arith.constant 0 : index
    %c16_40 = arith.constant 16 : index
    %c0_41 = arith.constant 0 : index
    %27 = vector.load %arg6[%c0_39, %c16_40, %c0_41] : memref<1x64x128xf32, #tpu.memory_space<vmem>>, vector<1x8x128xf32>
    %28 = arith.addf %27, %25 : vector<1x8x128xf32>
    %c0_42 = arith.constant 0 : index
    %c16_43 = arith.constant 16 : index
    %c0_44 = arith.constant 0 : index
    %29 = vector.load %arg6[%c0_42, %c16_43, %c0_44] : memref<1x64x128xf32, #tpu.memory_space<vmem>>, vector<1x8x128xf32>
    tpu.vector_store %arg6[%c0_42, %c16_43, %c0_44], %28 {strides = array<i32>} : memref<1x64x128xf32, #tpu.memory_space<vmem>>, vector<1x8x128xf32>,
    %c0_45 = arith.constant 0 : index
    %c16_46 = arith.constant 16 : index
    %c0_47 = arith.constant 0 : index
    %30 = vector.load %arg7[%c0_45, %c16_46, %c0_47] : memref<1x64x128xf32, #tpu.memory_space<vmem>>, vector<1x8x128xf32>
    %31 = arith.maximumf %30, %26 : vector<1x8x128xf32>
    %c0_48 = arith.constant 0 : index
    %c16_49 = arith.constant 16 : index
    %c0_50 = arith.constant 0 : index
    %32 = vector.load %arg7[%c0_48, %c16_49, %c0_50] : memref<1x64x128xf32, #tpu.memory_space<vmem>>, vector<1x8x128xf32>
    tpu.vector_store %arg7[%c0_48, %c16_49, %c0_50], %31 {strides = array<i32>} : memref<1x64x128xf32, #tpu.memory_space<vmem>>, vector<1x8x128xf32>,
    %c0_51 = arith.constant 0 : index
    %c24 = arith.constant 24 : index
    %c0_52 = arith.constant 0 : index
    %33 = vector.load %arg2[%c0_51, %c24, %c0_52] : memref<1x64x256xf32, #tpu.memory_space<vmem>>, vector<1x8x128xf32>
    %c0_53 = arith.constant 0 : index
    %c24_54 = arith.constant 24 : index
    %c128_55 = arith.constant 128 : index
    %34 = vector.load %arg2[%c0_53, %c24_54, %c128_55] : memref<1x64x256xf32, #tpu.memory_space<vmem>>, vector<1x8x128xf32>
    %35 = arith.addf %33, %34 : vector<1x8x128xf32>
    %36 = arith.maximumf %33, %34 : vector<1x8x128xf32>
    %c0_56 = arith.constant 0 : index
    %c24_57 = arith.constant 24 : index
    %c0_58 = arith.constant 0 : index
    %37 = vector.load %arg6[%c0_56, %c24_57, %c0_58] : memref<1x64x128xf32, #tpu.memory_space<vmem>>, vector<1x8x128xf32>
    %38 = arith.addf %37, %35 : vector<1x8x128xf32>
    %c0_59 = arith.constant 0 : index
    %c24_60 = arith.constant 24 : index
    %c0_61 = arith.constant 0 : index
    %39 = vector.load %arg6[%c0_59, %c24_60, %c0_61] : memref<1x64x128xf32, #tpu.memory_space<vmem>>, vector<1x8x128xf32>
    tpu.vector_store %arg6[%c0_59, %c24_60, %c0_61], %38 {strides = array<i32>} : memref<1x64x128xf32, #tpu.memory_space<vmem>>, vector<1x8x128xf32>,
    %c0_62 = arith.constant 0 : index
    %c24_63 = arith.constant 24 : index
    %c0_64 = arith.constant 0 : index
    %40 = vector.load %arg7[%c0_62, %c24_63, %c0_64] : memref<1x64x128xf32, #tpu.memory_space<vmem>>, vector<1x8x128xf32>
    %41 = arith.maximumf %40, %36 : vector<1x8x128xf32>
    %c0_65 = arith.constant 0 : index
    %c24_66 = arith.constant 24 : index
    %c0_67 = arith.constant 0 : index
    %42 = vector.load %arg7[%c0_65, %c24_66, %c0_67] : memref<1x64x128xf32, #tpu.memory_space<vmem>>, vector<1x8x128xf32>
    tpu.vector_store %arg7[%c0_65, %c24_66, %c0_67], %41 {strides = array<i32>} : memref<1x64x128xf32, #tpu.memory_space<vmem>>, vector<1x8x128xf32>,
    %c0_68 = arith.constant 0 : index
    %c32 = arith.constant 32 : index
    %c0_69 = arith.constant 0 : index
    %43 = vector.load %arg2[%c0_68, %c32, %c0_69] : memref<1x64x256xf32, #tpu.memory_space<vmem>>, vector<1x8x128xf32>
    %c0_70 = arith.constant 0 : index
    %c32_71 = arith.constant 32 : index
    %c128_72 = arith.constant 128 : index
    %44 = vector.load %arg2[%c0_70, %c32_71, %c128_72] : memref<1x64x256xf32, #tpu.memory_space<vmem>>, vector<1x8x128xf32>
    %45 = arith.addf %43, %44 : vector<1x8x128xf32>
    %46 = arith.maximumf %43, %44 : vector<1x8x128xf32>
    %c0_73 = arith.constant 0 : index
    %c32_74 = arith.constant 32 : index
    %c0_75 = arith.constant 0 : index
    %47 = vector.load %arg6[%c0_73, %c32_74, %c0_75] : memref<1x64x128xf32, #tpu.memory_space<vmem>>, vector<1x8x128xf32>
    %48 = arith.addf %47, %45 : vector<1x8x128xf32>
    %c0_76 = arith.constant 0 : index
    %c32_77 = arith.constant 32 : index
    %c0_78 = arith.constant 0 : index
    %49 = vector.load %arg6[%c0_76, %c32_77, %c0_78] : memref<1x64x128xf32, #tpu.memory_space<vmem>>, vector<1x8x128xf32>
    tpu.vector_store %arg6[%c0_76, %c32_77, %c0_78], %48 {strides = array<i32>} : memref<1x64x128xf32, #tpu.memory_space<vmem>>, vector<1x8x128xf32>,
    %c0_79 = arith.constant 0 : index
    %c32_80 = arith.constant 32 : index
    %c0_81 = arith.constant 0 : index
    %50 = vector.load %arg7[%c0_79, %c32_80, %c0_81] : memref<1x64x128xf32, #tpu.memory_space<vmem>>, vector<1x8x128xf32>
    %51 = arith.maximumf %50, %46 : vector<1x8x128xf32>
    %c0_82 = arith.constant 0 : index
    %c32_83 = arith.constant 32 : index
    %c0_84 = arith.constant 0 : index
    %52 = vector.load %arg7[%c0_82, %c32_83, %c0_84] : memref<1x64x128xf32, #tpu.memory_space<vmem>>, vector<1x8x128xf32>
    tpu.vector_store %arg7[%c0_82, %c32_83, %c0_84], %51 {strides = array<i32>} : memref<1x64x128xf32, #tpu.memory_space<vmem>>, vector<1x8x128xf32>,
    %c0_85 = arith.constant 0 : index
    %c40 = arith.constant 40 : index
    %c0_86 = arith.constant 0 : index
    %53 = vector.load %arg2[%c0_85, %c40, %c0_86] : memref<1x64x256xf32, #tpu.memory_space<vmem>>, vector<1x8x128xf32>
    %c0_87 = arith.constant 0 : index
    %c40_88 = arith.constant 40 : index
    %c128_89 = arith.constant 128 : index
    %54 = vector.load %arg2[%c0_87, %c40_88, %c128_89] : memref<1x64x256xf32, #tpu.memory_space<vmem>>, vector<1x8x128xf32>
    %55 = arith.addf %53, %54 : vector<1x8x128xf32>
    %56 = arith.maximumf %53, %54 : vector<1x8x128xf32>
    %c0_90 = arith.constant 0 : index
    %c40_91 = arith.constant 40 : index
    %c0_92 = arith.constant 0 : index
    %57 = vector.load %arg6[%c0_90, %c40_91, %c0_92] : memref<1x64x128xf32, #tpu.memory_space<vmem>>, vector<1x8x128xf32>
    %58 = arith.addf %57, %55 : vector<1x8x128xf32>
    %c0_93 = arith.constant 0 : index
    %c40_94 = arith.constant 40 : index
    %c0_95 = arith.constant 0 : index
    %59 = vector.load %arg6[%c0_93, %c40_94, %c0_95] : memref<1x64x128xf32, #tpu.memory_space<vmem>>, vector<1x8x128xf32>
    tpu.vector_store %arg6[%c0_93, %c40_94, %c0_95], %58 {strides = array<i32>} : memref<1x64x128xf32, #tpu.memory_space<vmem>>, vector<1x8x128xf32>,
    %c0_96 = arith.constant 0 : index
    %c40_97 = arith.constant 40 : index
    %c0_98 = arith.constant 0 : index
    %60 = vector.load %arg7[%c0_96, %c40_97, %c0_98] : memref<1x64x128xf32, #tpu.memory_space<vmem>>, vector<1x8x128xf32>
    %61 = arith.maximumf %60, %56 : vector<1x8x128xf32>
    %c0_99 = arith.constant 0 : index
    %c40_100 = arith.constant 40 : index
    %c0_101 = arith.constant 0 : index
    %62 = vector.load %arg7[%c0_99, %c40_100, %c0_101] : memref<1x64x128xf32, #tpu.memory_space<vmem>>, vector<1x8x128xf32>
    tpu.vector_store %arg7[%c0_99, %c40_100, %c0_101], %61 {strides = array<i32>} : memref<1x64x128xf32, #tpu.memory_space<vmem>>, vector<1x8x128xf32>,
    %c0_102 = arith.constant 0 : index
    %c48 = arith.constant 48 : index
    %c0_103 = arith.constant 0 : index
    %63 = vector.load %arg2[%c0_102, %c48, %c0_103] : memref<1x64x256xf32, #tpu.memory_space<vmem>>, vector<1x8x128xf32>
    %c0_104 = arith.constant 0 : index
    %c48_105 = arith.constant 48 : index
    %c128_106 = arith.constant 128 : index
    %64 = vector.load %arg2[%c0_104, %c48_105, %c128_106] : memref<1x64x256xf32, #tpu.memory_space<vmem>>, vector<1x8x128xf32>
    %65 = arith.addf %63, %64 : vector<1x8x128xf32>
    %66 = arith.maximumf %63, %64 : vector<1x8x128xf32>
    %c0_107 = arith.constant 0 : index
    %c48_108 = arith.constant 48 : index
    %c0_109 = arith.constant 0 : index
    %67 = vector.load %arg6[%c0_107, %c48_108, %c0_109] : memref<1x64x128xf32, #tpu.memory_space<vmem>>, vector<1x8x128xf32>
    %68 = arith.addf %67, %65 : vector<1x8x128xf32>
    %c0_110 = arith.constant 0 : index
    %c48_111 = arith.constant 48 : index
    %c0_112 = arith.constant 0 : index
    %69 = vector.load %arg6[%c0_110, %c48_111, %c0_112] : memref<1x64x128xf32, #tpu.memory_space<vmem>>, vector<1x8x128xf32>
    tpu.vector_store %arg6[%c0_110, %c48_111, %c0_112], %68 {strides = array<i32>} : memref<1x64x128xf32, #tpu.memory_space<vmem>>, vector<1x8x128xf32>,
    %c0_113 = arith.constant 0 : index
    %c48_114 = arith.constant 48 : index
    %c0_115 = arith.constant 0 : index
    %70 = vector.load %arg7[%c0_113, %c48_114, %c0_115] : memref<1x64x128xf32, #tpu.memory_space<vmem>>, vector<1x8x128xf32>
    %71 = arith.maximumf %70, %66 : vector<1x8x128xf32>
    %c0_116 = arith.constant 0 : index
    %c48_117 = arith.constant 48 : index
    %c0_118 = arith.constant 0 : index
    %72 = vector.load %arg7[%c0_116, %c48_117, %c0_118] : memref<1x64x128xf32, #tpu.memory_space<vmem>>, vector<1x8x128xf32>
    tpu.vector_store %arg7[%c0_116, %c48_117, %c0_118], %71 {strides = array<i32>} : memref<1x64x128xf32, #tpu.memory_space<vmem>>, vector<1x8x128xf32>,
    %c0_119 = arith.constant 0 : index
    %c56 = arith.constant 56 : index
    %c0_120 = arith.constant 0 : index
    %73 = vector.load %arg2[%c0_119, %c56, %c0_120] : memref<1x64x256xf32, #tpu.memory_space<vmem>>, vector<1x8x128xf32>
    %c0_121 = arith.constant 0 : index
    %c56_122 = arith.constant 56 : index
    %c128_123 = arith.constant 128 : index
    %74 = vector.load %arg2[%c0_121, %c56_122, %c128_123] : memref<1x64x256xf32, #tpu.memory_space<vmem>>, vector<1x8x128xf32>
    %75 = arith.addf %73, %74 : vector<1x8x128xf32>
    %76 = arith.maximumf %73, %74 : vector<1x8x128xf32>
    %c0_124 = arith.constant 0 : index
    %c56_125 = arith.constant 56 : index
    %c0_126 = arith.constant 0 : index
    %77 = vector.load %arg6[%c0_124, %c56_125, %c0_126] : memref<1x64x128xf32, #tpu.memory_space<vmem>>, vector<1x8x128xf32>
    %78 = arith.addf %77, %75 : vector<1x8x128xf32>
    %c0_127 = arith.constant 0 : index
    %c56_128 = arith.constant 56 : index
    %c0_129 = arith.constant 0 : index
    %79 = vector.load %arg6[%c0_127, %c56_128, %c0_129] : memref<1x64x128xf32, #tpu.memory_space<vmem>>, vector<1x8x128xf32>
    tpu.vector_store %arg6[%c0_127, %c56_128, %c0_129], %78 {strides = array<i32>} : memref<1x64x128xf32, #tpu.memory_space<vmem>>, vector<1x8x128xf32>,
    %c0_130 = arith.constant 0 : index
    %c56_131 = arith.constant 56 : index
    %c0_132 = arith.constant 0 : index
    %80 = vector.load %arg7[%c0_130, %c56_131, %c0_132] : memref<1x64x128xf32, #tpu.memory_space<vmem>>, vector<1x8x128xf32>
    %81 = arith.maximumf %80, %76 : vector<1x8x128xf32>
    %c0_133 = arith.constant 0 : index
    %c56_134 = arith.constant 56 : index
    %c0_135 = arith.constant 0 : index
    %82 = vector.load %arg7[%c0_133, %c56_134, %c0_135] : memref<1x64x128xf32, #tpu.memory_space<vmem>>, vector<1x8x128xf32>
    tpu.vector_store %arg7[%c0_133, %c56_134, %c0_135], %81 {strides = array<i32>} : memref<1x64x128xf32, #tpu.memory_space<vmem>>, vector<1x8x128xf32>,
    %c0_i32_136 = arith.constant 0 : i32
    %83 = arith.cmpi eq, %arg1, %c0_i32_136 : i32
    %84 = arith.extui %83 : i1 to i32
    %c0_i32_137 = arith.constant 0 : i32
    %85 = arith.cmpi ne, %84, %c0_i32_137 : i32
    scf.if %85 {
      %c0_138 = arith.constant 0 : index
      %c0_139 = arith.constant 0 : index
      %c0_140 = arith.constant 0 : index
      %86 = vector.load %arg6[%c0_138, %c0_139, %c0_140] : memref<1x64x128xf32, #tpu.memory_space<vmem>>, vector<1x64x128xf32>
      %cst = arith.constant dense<0.000000e+00> : vector<1x64xf32>
      %87 = vector.multi_reduction <add>, %86, %cst [2] : vector<1x64x128xf32> to vector<1x64xf32>
      %cst_141 = arith.constant 3.906250e-03 : f32
      %88 = vector.broadcast %cst_141 : f32 to vector<1x64xf32>
      %89 = arith.mulf %87, %88 : vector<1x64xf32>
      %c0_142 = arith.constant 0 : index
      %c0_143 = arith.constant 0 : index
      %c0_144 = arith.constant 0 : index
      %90 = vector.load %arg7[%c0_142, %c0_143, %c0_144] : memref<1x64x128xf32, #tpu.memory_space<vmem>>, vector<1x64x128xf32>
      %cst_145 = arith.constant dense<0xFF800000> : vector<1x64xf32>
      %91 = vector.multi_reduction <maximumf>, %90, %cst_145 [2] : vector<1x64x128xf32> to vector<1x64xf32>
      %92 = tpu.concatenate %89, %91 in 0 : vector<1x64xf32>, vector<1x64xf32> -> vector<2x64xf32>
      %c0_146 = arith.constant 0 : index
      %c0_147 = arith.constant 0 : index
      %93 = vector.load %arg3[%c0_146, %c0_147] : memref<64x4xf32, #tpu.memory_space<vmem>>, vector<64x4xf32>
      %cst_148 = arith.constant dense<0.000000e+00> : vector<2x4xf32>
      %94 = tpu.matmul %92, %93, %cst_148 {dimension_numbers = #tpu.dot_dimension_numbers<[1], [0], [0], [1], [0, 0, 1, 1], [], []>, precision = #tpu.contract_precision<fp32>} : vector<2x64xf32>, vector<64x4xf32>, vector<2x4xf32> -> vector<2x4xf32>
      %cst_149 = arith.constant 0.000000e+00 : f32
      %95 = vector.broadcast %cst_149 : f32 to vector<2x4xf32>
      %96 = arith.maximumf %94, %95 : vector<2x4xf32>
      %97 = vector.extract_strided_slice %96 {offsets = [0, 0], sizes = [1, 4], strides = [1, 1]} : vector<2x4xf32> to vector<1x4xf32>
      %98 = vector.extract_strided_slice %96 {offsets = [1, 0], sizes = [1, 4], strides = [1, 1]} : vector<2x4xf32> to vector<1x4xf32>
      %99 = arith.addf %97, %98 : vector<1x4xf32>
      %c0_150 = arith.constant 0 : index
      %c0_151 = arith.constant 0 : index
      %100 = vector.load %arg4[%c0_150, %c0_151] : memref<4x64xf32, #tpu.memory_space<vmem>>, vector<4x64xf32>
      %cst_152 = arith.constant dense<0.000000e+00> : vector<1x64xf32>
      %101 = tpu.matmul %99, %100, %cst_152 {dimension_numbers = #tpu.dot_dimension_numbers<[1], [0], [0], [1], [0, 0, 1, 1], [], []>, precision = #tpu.contract_precision<fp32>} : vector<1x4xf32>, vector<4x64xf32>, vector<1x64xf32> -> vector<1x64xf32>
      %102 = arith.negf %101 : vector<1x64xf32>
      %103 = math.exp %102 : vector<1x64xf32>
      %cst_153 = arith.constant 1.000000e+00 : f32
      %104 = vector.broadcast %cst_153 : f32 to vector<1x64xf32>
      %105 = arith.addf %104, %103 : vector<1x64xf32>
      %106 = arith.divf %104, %105 : vector<1x64xf32>
      %107 = vector.shape_cast %106 : vector<1x64xf32> to vector<1x1x64xf32>
      %c0_154 = arith.constant 0 : index
      %c0_155 = arith.constant 0 : index
      %c0_156 = arith.constant 0 : index
      %108 = vector.load %arg5[%c0_154, %c0_155, %c0_156] : memref<1x1x64xf32, #tpu.memory_space<vmem>>, vector<1x1x64xf32>
      tpu.vector_store %arg5[%c0_154, %c0_155, %c0_156], %107 {strides = array<i32>} : memref<1x1x64xf32, #tpu.memory_space<vmem>>, vector<1x1x64xf32>,
    } else {
    }
    return
  }
  func.func @transform_0(%arg0: i32, %arg1: i32) -> (i32, i32, i32) {
    %c0_i32 = arith.constant 0 : i32
    %c0_i32_0 = arith.constant 0 : i32
    return %arg0, %c0_i32, %arg1 : i32, i32, i32
  }
  func.func @transform_1(%arg0: i32, %arg1: i32) -> (i32, i32) {
    %c0_i32 = arith.constant 0 : i32
    %c0_i32_0 = arith.constant 0 : i32
    %c0_i32_1 = arith.constant 0 : i32
    return %c0_i32, %c0_i32_0 : i32, i32
  }
  func.func @transform_2(%arg0: i32, %arg1: i32) -> (i32, i32) {
    %c0_i32 = arith.constant 0 : i32
    %c0_i32_0 = arith.constant 0 : i32
    %c0_i32_1 = arith.constant 0 : i32
    return %c0_i32, %c0_i32_0 : i32, i32
  }
  func.func @transform_3(%arg0: i32, %arg1: i32) -> (i32, i32, i32) {
    %c0_i32 = arith.constant 0 : i32
    %c0_i32_0 = arith.constant 0 : i32
    %c0_i32_1 = arith.constant 0 : i32
    return %arg0, %c0_i32, %c0_i32_0 : i32, i32, i32
  }
}

</mosaic_0001>

<llo_original>
// kernel: tpu_custom_call.1
$region0: #{tpu_custom_call.1}
  #allocation0 [shape = 'u32[]', space=smem, size = 0x4, offset = 0x4, fixed_abs, tag = 'smem constant byte address 0x4 - core index']
  #allocation1 [shape = 'u32[144,128]{1,0:T(1,128)}', space=vmem, size = 0x12000, scoped, tag = 'internal scratch']
  #allocation2 [shape = 'f32[1,64,128]{2,1,0:T(8,128)}', space=vmem, size = 0x8000, scoped, tag = 'scratch operand']
  #allocation3 [shape = 'f32[1,64,128]{2,1,0:T(8,128)}', space=vmem, size = 0x8000, scoped, tag = 'scratch operand']
  %s0 = inlined_call_operand.hbm [shape: f32[2,64,256], index: 0, kind: input, shape index: {}]
  %s1 = inlined_call_operand.vmem [shape: f32[64,4], index: 1, kind: input, shape index: {}]
  %s2 = inlined_call_operand.vmem [shape: f32[4,64], index: 2, kind: input, shape index: {}]
  %s3 = inlined_call_operand.hbm [shape: f32[2,1,64], index: 3, kind: output, shape index: {}]
  %s4 = sld [smem:[#allocation0]]
  $region57: #{tpu_custom_call.1} parent=0
    _
  %s6 = ssub.s32 1, %s4
  %s7 = scalar_select 0, %s6, %s4
  $region1: #{tpu_custom_call.1} parent=0
    #allocation4 [shape = 'u8[131072]{0}', space=vmem, size = 0x20000, scoped, tag = 'input window, operand 0']
    #allocation5 [shape = 's32[2]{0}', space=sflag, size = 0x8, scoped, tag = 'scoped memory for tpu_custom_call.1']
    #allocation6 [shape = 's32[2]{0}', space=sflag, size = 0x8, scoped, tag = 'scoped memory for tpu_custom_call.1']
    #allocation7 [shape = 'u8[1024]{0}', space=vmem, size = 0x400, scoped, tag = 'output window, operand 0']
    %8 = vsyncpa [#allocation5], 0
    %s9 = scalar_lea.sflag [#allocation5], 1
    %10 = vsyncpa %s9, 0
    %11 = vsyncpa [#allocation6], 0
    %s12 = scalar_lea.sflag [#allocation6], 1
    %13 = vsyncpa %s12, 0
    loop: start=0, step=1, limit=4
    $region2: #{tpu_custom_call.1} parent=1 // loop_pre_header
      _
    $region3: #{tpu_custom_call.1} parent=1 // loop_header
      %s15 = sphi 0, %s19
      %p16 = scmp.ge.s32.totalorder %s15, 4
      %s22 = sphi 0, %s34
      %s23 = sphi 0, %s30
      %s24 = sphi 0, %s22
      %s25 = sphi 0, %s23
      %s26 = sphi 0, %s24
      %s27 = sphi 0, %s25
      %s39 = sphi 0, %s41
      %s42 = sphi 0, %s39
      %s43 = sphi 0, %s42
      %s59 = sphi 0, %s43
      %s63 = sphi 0, %s63
      %s65 = sphi 0, %s63
      %s66 = sphi 0, %s65
      %s80 = sphi 0, %s66
      %s84 = sphi 0, %s84
      %s86 = sphi 0, %s84
      %s87 = sphi 0, %s86
      %s101 = sphi 0, %s87
      %s107 = sphi 0, %s109
      %s110 = sphi 0, %s107
      %s111 = sphi 0, %s110
      %s127 = sphi 0, %s111
    $region4: #{tpu_custom_call.1} parent=1 // loop_header_branch
      %18 = sbr.rel (%p16) target = $region8
    $region5: #{tpu_custom_call.1} parent=1 // loop_body
      %s20 = ssub.s32 %s15, 1
      %s21 = ssub.s32 %s15, 2
      %s28 = sadd.s32 1, %s23
      %p29 = scmp.ge.s32.totalorder %s28, 1
      %s30 = scalar_select %p29, 0, %s28
      %s31 = sadd.s32 1, %s22
      %s32 = scalar_select %p29, %s31, %s22
      %p33 = scmp.ge.s32.totalorder %s32, 2
      %s34 = scalar_select %p33, 0, %s32
      %s35 = ssub.s32 %s22, %s34
      %s36 = ssub.s32 %s23, %s30
      %s37 = sor.u32 %s35, %s36
      %p38 = scmp.eq.s32.totalorder %s37, 0
      %s40 = sadd.s32 %s39, 1
      %s41 = scalar_select %p38, %s39, %s40
      %p44 = pneg %p38
      %p45 = scmp.eq.s32.totalorder %s15, 1
      %p46 = por %p44, %p45
      %p47 = scmp.ne.s32.totalorder %s39, %s42
      %p48 = scmp.eq.s32.totalorder %s15, 0
      %p49 = por %p47, %p48
      %p50 = scmp.ne.s32.totalorder %s39, %s42
      %p51 = scmp.eq.s32.totalorder %s20, 1
      %p52 = por %p50, %p51
      %p53 = scmp.ne.s32.totalorder %s42, %s43
      %p54 = scmp.eq.s32.totalorder %s20, 0
      %p55 = por %p53, %p54
      %p56 = scmp.ne.s32.totalorder %s42, %s43
      %p57 = scmp.eq.s32.totalorder %s21, 1
      %p58 = por %p56, %p57
      %p60 = scmp.ne.s32.totalorder %s43, %s59
      %p61 = scmp.eq.s32.totalorder %s21, 0
      %p62 = por %p60, %p61
      %s64 = sadd.s32 %s63, 1
      %p67 = scmp.eq.s32.totalorder %s15, 1
      %p68 = scmp.ne.s32.totalorder %s63, %s65
      %p69 = scmp.eq.s32.totalorder %s15, 0
      %p70 = por %p68, %p69
      %p71 = scmp.ne.s32.totalorder %s63, %s65
      %p72 = scmp.eq.s32.totalorder %s20, 1
      %p73 = por %p71, %p72
      %p74 = scmp.ne.s32.totalorder %s65, %s66
      %p75 = scmp.eq.s32.totalorder %s20, 0
      %p76 = por %p74, %p75
      %p77 = scmp.ne.s32.totalorder %s65, %s66
      %p78 = scmp.eq.s32.totalorder %s21, 1
      %p79 = por %p77, %p78
      %p81 = scmp.ne.s32.totalorder %s66, %s80
      %p82 = scmp.eq.s32.totalorder %s21, 0
      %p83 = por %p81, %p82
      %s85 = sadd.s32 %s84, 1
      %p88 = scmp.eq.s32.totalorder %s15, 1
      %p89 = scmp.ne.s32.totalorder %s84, %s86
      %p90 = scmp.eq.s32.totalorder %s15, 0
      %p91 = por %p89, %p90
      %p92 = scmp.ne.s32.totalorder %s84, %s86
      %p93 = scmp.eq.s32.totalorder %s20, 1
      %p94 = por %p92, %p93
      %p95 = scmp.ne.s32.totalorder %s86, %s87
      %p96 = scmp.eq.s32.totalorder %s20, 0
      %p97 = por %p95, %p96
      %p98 = scmp.ne.s32.totalorder %s86, %s87
      %p99 = scmp.eq.s32.totalorder %s21, 1
      %p100 = por %p98, %p99
      %p102 = scmp.ne.s32.totalorder %s87, %s101
      %p103 = scmp.eq.s32.totalorder %s21, 0
      %p104 = por %p102, %p103
      %s105 = ssub.s32 %s22, %s34
      %p106 = scmp.eq.s32.totalorder %s105, 0
      %s108 = sadd.s32 %s107, 1
      %s109 = scalar_select %p106, %s107, %s108
      %p112 = pneg %p106
      %p113 = scmp.eq.s32.totalorder %s15, 1
      %p114 = por %p112, %p113
      %p115 = scmp.ne.s32.totalorder %s107, %s110
      %p116 = scmp.eq.s32.totalorder %s15, 0
      %p117 = por %p115, %p116
      %p118 = scmp.ne.s32.totalorder %s107, %s110
      %p119 = scmp.eq.s32.totalorder %s20, 1
      %p120 = por %p118, %p119
      %p121 = scmp.ne.s32.totalorder %s110, %s111
      %p122 = scmp.eq.s32.totalorder %s20, 0
      %p123 = por %p121, %p122
      %p124 = scmp.ne.s32.totalorder %s110, %s111
      %p125 = scmp.eq.s32.totalorder %s21, 1
      %p126 = por %p124, %p125
      %p128 = scmp.ne.s32.totalorder %s111, %s127
      %p129 = scmp.eq.s32.totalorder %s21, 0
      %p130 = por %p128, %p129
      %p131 = scmp.le.s32.totalorder 1, %s15
      %p132 = scmp.lt.s32.totalorder %s15, 3
      %p133 = pnand %p131, %p132
      %p134 = pneg %p133
      // Predicated region
      $region9: #{tpu_custom_call.1} parent=5 // pred_check
        _
      $region10: #{tpu_custom_call.1} parent=5 // pred_check_branch
        %136 = sbr.rel (%p133) target = $region12
      $region11: #{tpu_custom_call.1} parent=5 // pred_region
        %s137 = ssub.s32 %s15, 1
        // Predicated region
        $region13: #{tpu_custom_call.1} parent=11 // pred_check
          %p138 = pneg %p76
        $region14: #{tpu_custom_call.1} parent=11 // pred_check_branch
          %140 = sbr.rel (%p138) target = $region16
        $region15: #{tpu_custom_call.1} parent=11 // pred_region
          _
        $region16: #{tpu_custom_call.1} parent=11 // pred_fallthru
          _
        // Predicated region
        $region17: #{tpu_custom_call.1} parent=11 // pred_check
          %p141 = pneg %p97
        $region18: #{tpu_custom_call.1} parent=11 // pred_check_branch
          %143 = sbr.rel (%p141) target = $region20
        $region19: #{tpu_custom_call.1} parent=11 // pred_region
          _
        $region20: #{tpu_custom_call.1} parent=11 // pred_fallthru
          _
      $region12: #{tpu_custom_call.1} parent=5 // pred_fallthru
        _
      %p144 = scmp.lt.s32.totalorder %s15, 2
      // Predicated region
      $region21: #{tpu_custom_call.1} parent=5 // pred_check
        %p145 = pneg %p144
      $region22: #{tpu_custom_call.1} parent=5 // pred_check_branch
        %147 = sbr.rel (%p145) target = $region24
      $region23: #{tpu_custom_call.1} parent=5 // pred_region
        // Predicated region
        $region25: #{tpu_custom_call.1} parent=23 // pred_check
          %p148 = pneg %p49
        $region26: #{tpu_custom_call.1} parent=23 // pred_check_branch
          %150 = sbr.rel (%p148) target = $region28
        $region27: #{tpu_custom_call.1} parent=23 // pred_region
          %s151 = sand.u32 %s39, 1
          %s152 = scalar_lea.sflag [#allocation5], %s151
          %s153 = sand.u32 %s39, 1
          %s154 = smul.addr %s153, 128
          %s155 = scalar_lea.vmem [#allocation4], %s154
          %s156 = smul.u32 2, %s23
          %s158 = ssub.s32 2048, 2048
          %159 = vsyncadd %s152, %s158
          %s160 = smul.addr %s22, 16
          %s161 = sadd.s32 %s156, %s160
          %s162 = smul.addr %s161, 128
          %s163 = scalar_lea.hbm %s0, %s162
          %s164 = sshll.u32 %s155, 4
          %s165 = int_to_ptr.vmem [resolvable:$true] %s164
          %170 = dma.hbm_to_vmem [thread:$0]  %s163, 2048, %s165, %s152, 256, 256, 16
        $region28: #{tpu_custom_call.1} parent=23 // pred_fallthru
          _
      $region24: #{tpu_custom_call.1} parent=5 // pred_fallthru
        _
      %p171 = scmp.le.s32.totalorder 1, %s15
      %p172 = scmp.lt.s32.totalorder %s15, 3
      %p173 = pnand %p171, %p172
      %p174 = pneg %p173
      // Predicated region
      $region29: #{tpu_custom_call.1} parent=5 // pred_check
        _
      $region30: #{tpu_custom_call.1} parent=5 // pred_check_branch
        %176 = sbr.rel (%p173) target = $region32
      $region31: #{tpu_custom_call.1} parent=5 // pred_region
        %s177 = ssub.s32 %s15, 1
        %s178 = sand.u32 %s42, 1
        %s179 = scalar_lea.sflag [#allocation5], %s178
        %s180 = sand.u32 %s42, 1
        %s181 = smul.addr %s180, 128
        %s182 = scalar_lea.vmem [#allocation4], %s181
        // Predicated region
        $region33: #{tpu_custom_call.1} parent=31 // pred_check
          %p183 = pneg %p55
        $region34: #{tpu_custom_call.1} parent=31 // pred_check_branch
          %185 = sbr.rel (%p183) target = $region36
        $region35: #{tpu_custom_call.1} parent=31 // pred_region
          %186 = dma.done %s179, 2048
        $region36: #{tpu_custom_call.1} parent=31 // pred_fallthru
          _
        %s187 = sand.u32 %s42, 1
        %s188 = scalar_lea.sflag [#allocation5], %s187
        %s189 = sand.u32 %s42, 1
        %s190 = smul.addr %s189, 128
        %s191 = scalar_lea.vmem [#allocation4], %s190
        %p192 = pneg %p55
        %p193 = pneg %p52
        %p194 = pneg %p76
        %p195 = pneg %p73
        %p196 = pneg %p97
        %p197 = pneg %p94
        %p198 = pneg %p123
        %p199 = pneg %p120
        %s200 = sand.u32 %s110, 1
        %s201 = scalar_lea.sflag [#allocation6], %s200
        %s202 = sand.u32 %s110, 1
        %s203 = scalar_lea.vmem [#allocation7], %s202
        %s204 = smul.u32 2, %s25
        %p205 = scmp.eq.s32.totalorder %s25, 0
        // Predicated region
        $region37: #{tpu_custom_call.1} parent=31 // pred_check
          %p206 = pneg %p205
        $region38: #{tpu_custom_call.1} parent=31 // pred_check_branch
          %208 = sbr.rel (%p206) target = $region40
        $region39: #{tpu_custom_call.1} parent=31 // pred_region
          %209 = vst [vmem:[#allocation2] sm:$0xff] 0.0
          %210 = vst [vmem:[#allocation2 + $0x8] sm:$0xff] 0.0
          %211 = vst [vmem:[#allocation2 + $0x10] sm:$0xff] 0.0
          %212 = vst [vmem:[#allocation2 + $0x18] sm:$0xff] 0.0
          %213 = vst [vmem:[#allocation2 + $0x20] sm:$0xff] 0.0
          %214 = vst [vmem:[#allocation2 + $0x28] sm:$0xff] 0.0
          %215 = vst [vmem:[#allocation2 + $0x30] sm:$0xff] 0.0
          %216 = vst [vmem:[#allocation2 + $0x38] sm:$0xff] 0.0
          %217 = vst [vmem:[#allocation3] sm:$0xff] -inf
          %218 = vst [vmem:[#allocation3 + $0x8] sm:$0xff] -inf
          %219 = vst [vmem:[#allocation3 + $0x10] sm:$0xff] -inf
          %220 = vst [vmem:[#allocation3 + $0x18] sm:$0xff] -inf
          %221 = vst [vmem:[#allocation3 + $0x20] sm:$0xff] -inf
          %222 = vst [vmem:[#allocation3 + $0x28] sm:$0xff] -inf
          %223 = vst [vmem:[#allocation3 + $0x30] sm:$0xff] -inf
          %224 = vst [vmem:[#allocation3 + $0x38] sm:$0xff] -inf
        $region40: #{tpu_custom_call.1} parent=31 // pred_fallthru
          _
        %v225 = vld [vmem:[%s182] sm:$0xff]
        %v226 = vld [vmem:[%s182 + $0x8] sm:$0xff]
        %v227 = vadd.f32 %v225, %v226
        %v228 = vmax.f32 %v225, %v226
        %v229 = vld [vmem:[#allocation2] sm:$0xff]
        %v230 = vadd.f32 %v229, %v227
        %231 = vst [vmem:[#allocation2] sm:$0xff] %v230
        %v232 = vld [vmem:[#allocation3] sm:$0xff]
        %v233 = vmax.f32 %v232, %v228
        %234 = vst [vmem:[#allocation3] sm:$0xff] %v233
        %v235 = vld [vmem:[%s182 + $0x10] sm:$0xff]
        %v236 = vld [vmem:[%s182 + $0x18] sm:$0xff]
        %v237 = vadd.f32 %v235, %v236
        %v238 = vmax.f32 %v235, %v236
        %v239 = vld [vmem:[#allocation2 + $0x8] sm:$0xff]
        %v240 = vadd.f32 %v239, %v237
        %241 = vst [vmem:[#allocation2 + $0x8] sm:$0xff] %v240
        %v242 = vld [vmem:[#allocation3 + $0x8] sm:$0xff]
        %v243 = vmax.f32 %v242, %v238
        %244 = vst [vmem:[#allocation3 + $0x8] sm:$0xff] %v243
        %v245 = vld [vmem:[%s182 + $0x20] sm:$0xff]
        %v246 = vld [vmem:[%s182 + $0x28] sm:$0xff]
        %v247 = vadd.f32 %v245, %v246
        %v248 = vmax.f32 %v245, %v246
        %v249 = vld [vmem:[#allocation2 + $0x10] sm:$0xff]
        %v250 = vadd.f32 %v249, %v247
        %251 = vst [vmem:[#allocation2 + $0x10] sm:$0xff] %v250
        %v252 = vld [vmem:[#allocation3 + $0x10] sm:$0xff]
        %v253 = vmax.f32 %v252, %v248
        %254 = vst [vmem:[#allocation3 + $0x10] sm:$0xff] %v253
        %v255 = vld [vmem:[%s182 + $0x30] sm:$0xff]
        %v256 = vld [vmem:[%s182 + $0x38] sm:$0xff]
        %v257 = vadd.f32 %v255, %v256
        %v258 = vmax.f32 %v255, %v256
        %v259 = vld [vmem:[#allocation2 + $0x18] sm:$0xff]
        %v260 = vadd.f32 %v259, %v257
        %261 = vst [vmem:[#allocation2 + $0x18] sm:$0xff] %v260
        %v262 = vld [vmem:[#allocation3 + $0x18] sm:$0xff]
        %v263 = vmax.f32 %v262, %v258
        %264 = vst [vmem:[#allocation3 + $0x18] sm:$0xff] %v263
        %v265 = vld [vmem:[%s182 + $0x40] sm:$0xff]
        %v266 = vld [vmem:[%s182 + $0x48] sm:$0xff]
        %v267 = vadd.f32 %v265, %v266
        %v268 = vmax.f32 %v265, %v266
        %v269 = vld [vmem:[#allocation2 + $0x20] sm:$0xff]
        %v270 = vadd.f32 %v269, %v267
        %271 = vst [vmem:[#allocation2 + $0x20] sm:$0xff] %v270
        %v272 = vld [vmem:[#allocation3 + $0x20] sm:$0xff]
        %v273 = vmax.f32 %v272, %v268
        %274 = vst [vmem:[#allocation3 + $0x20] sm:$0xff] %v273
        %v275 = vld [vmem:[%s182 + $0x50] sm:$0xff]
        %v276 = vld [vmem:[%s182 + $0x58] sm:$0xff]
        %v277 = vadd.f32 %v275, %v276
        %v278 = vmax.f32 %v275, %v276
        %v279 = vld [vmem:[#allocation2 + $0x28] sm:$0xff]
        %v280 = vadd.f32 %v279, %v277
        %281 = vst [vmem:[#allocation2 + $0x28] sm:$0xff] %v280
        %v282 = vld [vmem:[#allocation3 + $0x28] sm:$0xff]
        %v283 = vmax.f32 %v282, %v278
        %284 = vst [vmem:[#allocation3 + $0x28] sm:$0xff] %v283
        %v285 = vld [vmem:[%s182 + $0x60] sm:$0xff]
        %v286 = vld [vmem:[%s182 + $0x68] sm:$0xff]
        %v287 = vadd.f32 %v285, %v286
        %v288 = vmax.f32 %v285, %v286
        %v289 = vld [vmem:[#allocation2 + $0x30] sm:$0xff]
        %v290 = vadd.f32 %v289, %v287
        %291 = vst [vmem:[#allocation2 + $0x30] sm:$0xff] %v290
        %v292 = vld [vmem:[#allocation3 + $0x30] sm:$0xff]
        %v293 = vmax.f32 %v292, %v288
        %294 = vst [vmem:[#allocation3 + $0x30] sm:$0xff] %v293
        %v295 = vld [vmem:[%s182 + $0x70] sm:$0xff]
        %v296 = vld [vmem:[%s182 + $0x78] sm:$0xff]
        %v297 = vadd.f32 %v295, %v296
        %v298 = vmax.f32 %v295, %v296
        %v299 = vld [vmem:[#allocation2 + $0x38] sm:$0xff]
        %v300 = vadd.f32 %v299, %v297
        %301 = vst [vmem:[#allocation2 + $0x38] sm:$0xff] %v300
        %v302 = vld [vmem:[#allocation3 + $0x38] sm:$0xff]
        %v303 = vmax.f32 %v302, %v298
        %304 = vst [vmem:[#allocation3 + $0x38] sm:$0xff] %v303
        // Predicated region
        $region41: #{tpu_custom_call.1} parent=31 // pred_check
          %p305 = pneg %p205
        $region42: #{tpu_custom_call.1} parent=31 // pred_check_branch
          %307 = sbr.rel (%p305) target = $region44
        $region43: #{tpu_custom_call.1} parent=31 // pred_region
          %v308 = vld [vmem:[#allocation2] sm:$0xff]
          %v309 = vld [vmem:[#allocation2 + $0x8] sm:$0xff]
          %v310 = vld [vmem:[#allocation2 + $0x10] sm:$0xff]
          %v311 = vld [vmem:[#allocation2 + $0x18] sm:$0xff]
          %v312 = vld [vmem:[#allocation2 + $0x20] sm:$0xff]
          %v313 = vld [vmem:[#allocation2 + $0x28] sm:$0xff]
          %v314 = vld [vmem:[#allocation2 + $0x30] sm:$0xff]
          %v315 = vld [vmem:[#allocation2 + $0x38] sm:$0xff]
          %316 = vadd.xlane.f32.xlu0 %v308
          %v317 = vpop.xlane.xlu0 %316
          %318 = vadd.xlane.f32.xlu0 %v309
          %v319 = vpop.xlane.xlu0 %318
          %320 = vadd.xlane.f32.xlu0 %v310
          %v321 = vpop.xlane.xlu0 %320
          %322 = vadd.xlane.f32.xlu0 %v311
          %v323 = vpop.xlane.xlu0 %322
          %324 = vadd.xlane.f32.xlu0 %v312
          %v325 = vpop.xlane.xlu0 %324
          %326 = vadd.xlane.f32.xlu0 %v313
          %v327 = vpop.xlane.xlu0 %326
          %328 = vadd.xlane.f32.xlu0 %v314
          %v329 = vpop.xlane.xlu0 %328
          %330 = vadd.xlane.f32.xlu0 %v315
          %v331 = vpop.xlane.xlu0 %330
          %v332 = vmul.f32 %v317, 0.00390625
          %v333 = vmul.f32 %v319, 0.00390625
          %v334 = vmul.f32 %v321, 0.00390625
          %v335 = vmul.f32 %v323, 0.00390625
          %v336 = vmul.f32 %v325, 0.00390625
          %v337 = vmul.f32 %v327, 0.00390625
          %v338 = vmul.f32 %v329, 0.00390625
          %v339 = vmul.f32 %v331, 0.00390625
          %v340 = vld [vmem:[#allocation3] sm:$0xff]
          %v341 = vld [vmem:[#allocation3 + $0x8] sm:$0xff]
          %v342 = vld [vmem:[#allocation3 + $0x10] sm:$0xff]
          %v343 = vld [vmem:[#allocation3 + $0x18] sm:$0xff]
          %v344 = vld [vmem:[#allocation3 + $0x20] sm:$0xff]
          %v345 = vld [vmem:[#allocation3 + $0x28] sm:$0xff]
          %v346 = vld [vmem:[#allocation3 + $0x30] sm:$0xff]
          %v347 = vld [vmem:[#allocation3 + $0x38] sm:$0xff]
          %348 = vmax.xlane.f32.xlu0 %v340
          %v349 = vpop.xlane.xlu0 %348
          %350 = vmax.xlane.f32.xlu0 %v341
          %v351 = vpop.xlane.xlu0 %350
          %352 = vmax.xlane.f32.xlu0 %v342
          %v353 = vpop.xlane.xlu0 %352
          %354 = vmax.xlane.f32.xlu0 %v343
          %v355 = vpop.xlane.xlu0 %354
          %356 = vmax.xlane.f32.xlu0 %v344
          %v357 = vpop.xlane.xlu0 %356
          %358 = vmax.xlane.f32.xlu0 %v345
          %v359 = vpop.xlane.xlu0 %358
          %360 = vmax.xlane.f32.xlu0 %v346
          %v361 = vpop.xlane.xlu0 %360
          %362 = vmax.xlane.f32.xlu0 %v347
          %v363 = vpop.xlane.xlu0 %362
          %v372 = vlaneseq
          %v373 = vand.u32 %v372, 127
          %v374 = vlaneseq
          %v375 = vshrl.u32 %v374, 7
          %v376 = vsub.s32 %v373, %v375
          %v377 = vrot.slane %v332, %v376
          %v378 = vadd.s32 %v373, 4294967288
          %v379 = vlaneseq
          %v380 = vshrl.u32 %v379, 7
          %v381 = vsub.s32 %v378, %v380
          %v382 = vrot.slane %v333, %v381
          %vm383 = vcmask 130112
          %v384 = vsel %vm383, %v382, %v377
          %v385 = vadd.s32 %v373, 4294967280
          %v386 = vlaneseq
          %v387 = vshrl.u32 %v386, 7
          %v388 = vsub.s32 %v385, %v387
          %v389 = vrot.slane %v334, %v388
          %vm390 = vcmask 195712
          %v391 = vsel %vm390, %v389, %v384
          %v392 = vadd.s32 %v373, 4294967272
          %v393 = vlaneseq
          %v394 = vshrl.u32 %v393, 7
          %v395 = vsub.s32 %v392, %v394
          %v396 = vrot.slane %v335, %v395
          %vm397 = vcmask 261312
          %v398 = vsel %vm397, %v396, %v391
          %v399 = vadd.s32 %v373, 4294967264
          %v400 = vlaneseq
          %v401 = vshrl.u32 %v400, 7
          %v402 = vsub.s32 %v399, %v401
          %v403 = vrot.slane %v336, %v402
          %vm404 = vcmask 326912
          %v405 = vsel %vm404, %v403, %v398
          %v406 = vadd.s32 %v373, 4294967256
          %v407 = vlaneseq
          %v408 = vshrl.u32 %v407, 7
          %v409 = vsub.s32 %v406, %v408
          %v410 = vrot.slane %v337, %v409
          %vm411 = vcmask 392512
          %v412 = vsel %vm411, %v410, %v405
          %v413 = vadd.s32 %v373, 4294967248
          %v414 = vlaneseq
          %v415 = vshrl.u32 %v414, 7
          %v416 = vsub.s32 %v413, %v415
          %v417 = vrot.slane %v338, %v416
          %vm418 = vcmask 458112
          %v419 = vsel %vm418, %v417, %v412
          %v420 = vadd.s32 %v373, 4294967240
          %v421 = vlaneseq
          %v422 = vshrl.u32 %v421, 7
          %v423 = vsub.s32 %v420, %v422
          %v424 = vrot.slane %v339, %v423
          %vm425 = vcmask 523712
          %v426 = vsel %vm425, %v424, %v419
          %v436 = vlaneseq
          %v437 = vshrl.u32 %v436, 7
          %v438 = vsub.s32 %v373, %v437
          %v439 = vrot.slane %v349, %v438
          %v440 = vlaneseq
          %v441 = vshrl.u32 %v440, 7
          %v442 = vsub.s32 %v378, %v441
          %v443 = vrot.slane %v351, %v442
          %v444 = vsel %vm383, %v443, %v439
          %v445 = vlaneseq
          %v446 = vshrl.u32 %v445, 7
          %v447 = vsub.s32 %v385, %v446
          %v448 = vrot.slane %v353, %v447
          %v449 = vsel %vm390, %v448, %v444
          %v450 = vlaneseq
          %v451 = vshrl.u32 %v450, 7
          %v452 = vsub.s32 %v392, %v451
          %v453 = vrot.slane %v355, %v452
          %v454 = vsel %vm397, %v453, %v449
          %v455 = vlaneseq
          %v456 = vshrl.u32 %v455, 7
          %v457 = vsub.s32 %v399, %v456
          %v458 = vrot.slane %v357, %v457
          %v459 = vsel %vm404, %v458, %v454
          %v460 = vlaneseq
          %v461 = vshrl.u32 %v460, 7
          %v462 = vsub.s32 %v406, %v461
          %v463 = vrot.slane %v359, %v462
          %v464 = vsel %vm411, %v463, %v459
          %v465 = vlaneseq
          %v466 = vshrl.u32 %v465, 7
          %v467 = vsub.s32 %v413, %v466
          %v468 = vrot.slane %v361, %v467
          %v469 = vsel %vm418, %v468, %v464
          %v470 = vlaneseq
          %v471 = vshrl.u32 %v470, 7
          %v472 = vsub.s32 %v420, %v471
          %v473 = vrot.slane %v363, %v472
          %v474 = vsel %vm425, %v473, %v469
          %vm476 = vcmask 1040384
          %v477 = vsel %vm476, %v426, %v474
          %v478 = vld [vmem:[%s1] sm:$0xff]
          %v479 = vld [vmem:[%s1 + $0x8] sm:$0xff]
          %v480 = vld [vmem:[%s1 + $0x10] sm:$0xff]
          %v481 = vld [vmem:[%s1 + $0x18] sm:$0xff]
          %v482 = vld [vmem:[%s1 + $0x20] sm:$0xff]
          %v483 = vld [vmem:[%s1 + $0x28] sm:$0xff]
          %v484 = vld [vmem:[%s1 + $0x30] sm:$0xff]
          %v485 = vld [vmem:[%s1 + $0x38] sm:$0xff]
          %vm486 = vcmask 523264
          %v488 = vsel %vm486, %v477, 0
          %490 = vmatprep.subr.mxu0 0.0
          %v491 = vand.u32 %v478, 4294901760
          %492 = vmatpush1.msra.mxu0 %v491
          %493 = vmatprep.subr.mxu0 0.0
          %v494 = vand.u32 %v479, 4294901760
          %495 = vmatpush1.msra.mxu0 %v494
          %496 = vmatprep.subr.mxu0 0.0
          %v497 = vand.u32 %v480, 4294901760
          %498 = vmatpush1.msra.mxu0 %v497
          %499 = vmatprep.subr.mxu0 0.0
          %v500 = vand.u32 %v481, 4294901760
          %501 = vmatpush1.msra.mxu0 %v500
          %502 = vmatprep.subr.mxu0 0.0
          %v503 = vand.u32 %v482, 4294901760
          %504 = vmatpush1.msra.mxu0 %v503
          %505 = vmatprep.subr.mxu0 0.0
          %v506 = vand.u32 %v483, 4294901760
          %507 = vmatpush1.msra.mxu0 %v506
          %508 = vmatprep.subr.mxu0 0.0
          %v509 = vand.u32 %v484, 4294901760
          %510 = vmatpush1.msra.mxu0 %v509
          %511 = vmatprep.subr.mxu0 0.0
          %v512 = vand.u32 %v485, 4294901760
          %513 = vmatpush1.msra.mxu0 %v512
          %514 = vmatprep.subr.mxu0 0.0
          %515 = vmatpush1.msra.mxu0 0.0
          %516 = vmatprep.subr.mxu0 0.0
          %517 = vmatpush1.msra.mxu0 0.0
          %518 = vmatprep.subr.mxu0 0.0
          %519 = vmatpush1.msra.mxu0 0.0
          %520 = vmatprep.subr.mxu0 0.0
          %521 = vmatpush1.msra.mxu0 0.0
          %522 = vmatprep.subr.mxu0 0.0
          %523 = vmatpush1.msra.mxu0 0.0
          %524 = vmatprep.subr.mxu0 0.0
          %525 = vmatpush1.msra.mxu0 0.0
          %526 = vmatprep.subr.mxu0 0.0
          %527 = vmatpush1.msra.mxu0 0.0
          %528 = vmatprep.subr.mxu0 0.0
          %529 = vmatpush1.msra.mxu0 0.0
          %530 = vmatprep.subr.mxu0 0.0
          %531 = vmatpush1.msra.mxu0 0.0
          %532 = vmatprep.subr.mxu0 0.0
          %533 = vmatpush1.msra.mxu0 0.0
          %534 = vmatprep.subr.mxu0 0.0
          %535 = vmatpush1.msra.mxu0 0.0
          %536 = vmatprep.subr.mxu0 0.0
          %537 = vmatpush1.msra.mxu0 0.0
          %538 = vmatprep.subr.mxu0 0.0
          %539 = vmatpush1.msra.mxu0 0.0
          %540 = vmatprep.subr.mxu0 0.0
          %541 = vmatpush1.msra.mxu0 0.0
          %542 = vmatprep.subr.mxu0 0.0
          %543 = vmatpush1.msra.mxu0 0.0
          %544 = vmatprep.subr.mxu0 0.0
          %545 = vmatpush1.msra.mxu0 0.0
          %546 = vmatprep.subr.mxu0 0.0
          %547 = vmatpush1.msra.mxu0 0.0
          %548 = vmatprep.subr.mxu0 0.0
          %549 = vmatpush1.msra.mxu0 0.0
          %550 = vmatprep.subr.mxu0 0.0
          %551 = vmatpush1.msra.mxu0 0.0
          %552 = vmatprep.subr.mxu0 0.0
          %553 = vmatpush1.msra.mxu0 0.0
          %554 = vmatprep.subr.mxu0 0.0
          %555 = vmatpush1.msra.mxu0 0.0
          %556 = vmatprep.subr.mxu0 0.0
          %557 = vmatpush1.msra.mxu0 0.0
          %558 = vmatprep.subr.mxu0 0.0
          %559 = vmatpush1.msra.mxu0 0.0
          %560 = vmatprep.subr.mxu0 0.0
          %561 = vmatpush1.msra.mxu0 0.0
          %562 = vmatprep.mubr.f32.mxu0 0.0
          %v563 = vand.u32 %v488, 4294901760
          %v564 = vsub.f32 %v488, %v563
          %v565 = vand.u32 %v564, 4294901760
          %v566 = vsub.f32 %v564, %v565
          %v567 = vand.u32 %v566, 4294901760
          %568 = vmatmul.mubr.f32.gmra.mrb[0].mxu0 %v567
          %v569 = vpop.f32.mrb[0].mxu0
          %v570 = vadd.f32 0.0, %v569
          %v571 = vpop.f32.mrb[0].mxu0
          %572 = vdwg.mxu0
          %573 = vmatprep.subr.mxu0 0.0
          %v574 = vand.u32 %v478, 4294901760
          %v575 = vsub.f32 %v478, %v574
          %v576 = vand.u32 %v575, 4294901760
          %v577 = vsub.f32 %v575, %v576
          %v578 = vand.u32 %v577, 4294901760
          %579 = vmatpush1.msra.mxu0 %v578
          %580 = vmatprep.subr.mxu0 0.0
          %v581 = vand.u32 %v479, 4294901760
          %v582 = vsub.f32 %v479, %v581
          %v583 = vand.u32 %v582, 4294901760
          %v584 = vsub.f32 %v582, %v583
          %v585 = vand.u32 %v584, 4294901760
          %586 = vmatpush1.msra.mxu0 %v585
          %587 = vmatprep.subr.mxu0 0.0
          %v588 = vand.u32 %v480, 4294901760
          %v589 = vsub.f32 %v480, %v588
          %v590 = vand.u32 %v589, 4294901760
          %v591 = vsub.f32 %v589, %v590
          %v592 = vand.u32 %v591, 4294901760
          %593 = vmatpush1.msra.mxu0 %v592
          %594 = vmatprep.subr.mxu0 0.0
          %v595 = vand.u32 %v481, 4294901760
          %v596 = vsub.f32 %v481, %v595
          %v597 = vand.u32 %v596, 4294901760
          %v598 = vsub.f32 %v596, %v597
          %v599 = vand.u32 %v598, 4294901760
          %600 = vmatpush1.msra.mxu0 %v599
          %601 = vmatprep.subr.mxu0 0.0
          %v602 = vand.u32 %v482, 4294901760
          %v603 = vsub.f32 %v482, %v602
          %v604 = vand.u32 %v603, 4294901760
          %v605 = vsub.f32 %v603, %v604
          %v606 = vand.u32 %v605, 4294901760
          %607 = vmatpush1.msra.mxu0 %v606
          %608 = vmatprep.subr.mxu0 0.0
          %v609 = vand.u32 %v483, 4294901760
          %v610 = vsub.f32 %v483, %v609
          %v611 = vand.u32 %v610, 4294901760
          %v612 = vsub.f32 %v610, %v611
          %v613 = vand.u32 %v612, 4294901760
          %614 = vmatpush1.msra.mxu0 %v613
          %615 = vmatprep.subr.mxu0 0.0
          %v616 = vand.u32 %v484, 4294901760
          %v617 = vsub.f32 %v484, %v616
          %v618 = vand.u32 %v617, 4294901760
          %v619 = vsub.f32 %v617, %v618
          %v620 = vand.u32 %v619, 4294901760
          %621 = vmatpush1.msra.mxu0 %v620
          %622 = vmatprep.subr.mxu0 0.0
          %v623 = vand.u32 %v485, 4294901760
          %v624 = vsub.f32 %v485, %v623
          %v625 = vand.u32 %v624, 4294901760
          %v626 = vsub.f32 %v624, %v625
          %v627 = vand.u32 %v626, 4294901760
          %628 = vmatpush1.msra.mxu0 %v627
          %629 = vmatprep.subr.mxu0 0.0
          %630 = vmatpush1.msra.mxu0 0.0
          %631 = vmatprep.subr.mxu0 0.0
          %632 = vmatpush1.msra.mxu0 0.0
          %633 = vmatprep.subr.mxu0 0.0
          %634 = vmatpush1.msra.mxu0 0.0
          %635 = vmatprep.subr.mxu0 0.0
          %636 = vmatpush1.msra.mxu0 0.0
          %637 = vmatprep.subr.mxu0 0.0
          %638 = vmatpush1.msra.mxu0 0.0
          %639 = vmatprep.subr.mxu0 0.0
          %640 = vmatpush1.msra.mxu0 0.0
          %641 = vmatprep.subr.mxu0 0.0
          %642 = vmatpush1.msra.mxu0 0.0
          %643 = vmatprep.subr.mxu0 0.0
          %644 = vmatpush1.msra.mxu0 0.0
          %645 = vmatprep.subr.mxu0 0.0
          %646 = vmatpush1.msra.mxu0 0.0
          %647 = vmatprep.subr.mxu0 0.0
          %648 = vmatpush1.msra.mxu0 0.0
          %649 = vmatprep.subr.mxu0 0.0
          %650 = vmatpush1.msra.mxu0 0.0
          %651 = vmatprep.subr.mxu0 0.0
          %652 = vmatpush1.msra.mxu0 0.0
          %653 = vmatprep.subr.mxu0 0.0
          %654 = vmatpush1.msra.mxu0 0.0
          %655 = vmatprep.subr.mxu0 0.0
          %656 = vmatpush1.msra.mxu0 0.0
          %657 = vmatprep.subr.mxu0 0.0
          %658 = vmatpush1.msra.mxu0 0.0
          %659 = vmatprep.subr.mxu0 0.0
          %660 = vmatpush1.msra.mxu0 0.0
          %661 = vmatprep.subr.mxu0 0.0
          %662 = vmatpush1.msra.mxu0 0.0
          %663 = vmatprep.subr.mxu0 0.0
          %664 = vmatpush1.msra.mxu0 0.0
          %665 = vmatprep.subr.mxu0 0.0
          %666 = vmatpush1.msra.mxu0 0.0
          %667 = vmatprep.subr.mxu0 0.0
          %668 = vmatpush1.msra.mxu0 0.0
          %669 = vmatprep.subr.mxu0 0.0
          %670 = vmatpush1.msra.mxu0 0.0
          %671 = vmatprep.subr.mxu0 0.0
          %672 = vmatpush1.msra.mxu0 0.0
          %673 = vmatprep.subr.mxu0 0.0
          %674 = vmatpush1.msra.mxu0 0.0
          %675 = vmatprep.subr.mxu0 0.0
          %676 = vmatpush1.msra.mxu0 0.0
          %677 = vmatprep.mubr.f32.mxu0 0.0
          %v678 = vand.u32 %v488, 4294901760
          %679 = vmatmul.mubr.f32.gmra.mrb[0].mxu0 %v678
          %v680 = vpop.f32.mrb[0].mxu0
          %v681 = vadd.f32 %v570, %v680
          %v682 = vpop.f32.mrb[0].mxu0
          %683 = vdwg.mxu0
          %684 = vmatprep.subr.mxu0 0.0
          %v685 = vand.u32 %v478, 4294901760
          %v686 = vsub.f32 %v478, %v685
          %687 = vmatpush1.msra.mxu0 %v686
          %688 = vmatprep.subr.mxu0 0.0
          %v689 = vand.u32 %v479, 4294901760
          %v690 = vsub.f32 %v479, %v689
          %691 = vmatpush1.msra.mxu0 %v690
          %692 = vmatprep.subr.mxu0 0.0
          %v693 = vand.u32 %v480, 4294901760
          %v694 = vsub.f32 %v480, %v693
          %695 = vmatpush1.msra.mxu0 %v694
          %696 = vmatprep.subr.mxu0 0.0
          %v697 = vand.u32 %v481, 4294901760
          %v698 = vsub.f32 %v481, %v697
          %699 = vmatpush1.msra.mxu0 %v698
          %700 = vmatprep.subr.mxu0 0.0
          %v701 = vand.u32 %v482, 4294901760
          %v702 = vsub.f32 %v482, %v701
          %703 = vmatpush1.msra.mxu0 %v702
          %704 = vmatprep.subr.mxu0 0.0
          %v705 = vand.u32 %v483, 4294901760
          %v706 = vsub.f32 %v483, %v705
          %707 = vmatpush1.msra.mxu0 %v706
          %708 = vmatprep.subr.mxu0 0.0
          %v709 = vand.u32 %v484, 4294901760
          %v710 = vsub.f32 %v484, %v709
          %711 = vmatpush1.msra.mxu0 %v710
          %712 = vmatprep.subr.mxu0 0.0
          %v713 = vand.u32 %v485, 4294901760
          %v714 = vsub.f32 %v485, %v713
          %715 = vmatpush1.msra.mxu0 %v714
          %716 = vmatprep.subr.mxu0 0.0
          %717 = vmatpush1.msra.mxu0 0.0
          %718 = vmatprep.subr.mxu0 0.0
          %719 = vmatpush1.msra.mxu0 0.0
          %720 = vmatprep.subr.mxu0 0.0
          %721 = vmatpush1.msra.mxu0 0.0
          %722 = vmatprep.subr.mxu0 0.0
          %723 = vmatpush1.msra.mxu0 0.0
          %724 = vmatprep.subr.mxu0 0.0
          %725 = vmatpush1.msra.mxu0 0.0
          %726 = vmatprep.subr.mxu0 0.0
          %727 = vmatpush1.msra.mxu0 0.0
          %728 = vmatprep.subr.mxu0 0.0
          %729 = vmatpush1.msra.mxu0 0.0
          %730 = vmatprep.subr.mxu0 0.0
          %731 = vmatpush1.msra.mxu0 0.0
          %732 = vmatprep.subr.mxu0 0.0
          %733 = vmatpush1.msra.mxu0 0.0
          %734 = vmatprep.subr.mxu0 0.0
          %735 = vmatpush1.msra.mxu0 0.0
          %736 = vmatprep.subr.mxu0 0.0
          %737 = vmatpush1.msra.mxu0 0.0
          %738 = vmatprep.subr.mxu0 0.0
          %739 = vmatpush1.msra.mxu0 0.0
          %740 = vmatprep.subr.mxu0 0.0
          %741 = vmatpush1.msra.mxu0 0.0
          %742 = vmatprep.subr.mxu0 0.0
          %743 = vmatpush1.msra.mxu0 0.0
          %744 = vmatprep.subr.mxu0 0.0
          %745 = vmatpush1.msra.mxu0 0.0
          %746 = vmatprep.subr.mxu0 0.0
          %747 = vmatpush1.msra.mxu0 0.0
          %748 = vmatprep.subr.mxu0 0.0
          %749 = vmatpush1.msra.mxu0 0.0
          %750 = vmatprep.subr.mxu0 0.0
          %751 = vmatpush1.msra.mxu0 0.0
          %752 = vmatprep.subr.mxu0 0.0
          %753 = vmatpush1.msra.mxu0 0.0
          %754 = vmatprep.subr.mxu0 0.0
          %755 = vmatpush1.msra.mxu0 0.0
          %756 = vmatprep.subr.mxu0 0.0
          %757 = vmatpush1.msra.mxu0 0.0
          %758 = vmatprep.subr.mxu0 0.0
          %759 = vmatpush1.msra.mxu0 0.0
          %760 = vmatprep.subr.mxu0 0.0
          %761 = vmatpush1.msra.mxu0 0.0
          %762 = vmatprep.subr.mxu0 0.0
          %763 = vmatpush1.msra.mxu0 0.0
          %764 = vmatprep.mubr.f32.mxu0 0.0
          %v765 = vand.u32 %v488, 4294901760
          %v766 = vsub.f32 %v488, %v765
          %767 = vmatmul.mubr.f32.gmra.mrb[0].mxu0 %v766
          %v768 = vpop.f32.mrb[0].mxu0
          %v769 = vadd.f32 %v681, %v768
          %v770 = vpop.f32.mrb[0].mxu0
          %771 = vdwg.mxu0
          %772 = vmatprep.subr.mxu0 0.0
          %v773 = vand.u32 %v478, 4294901760
          %774 = vmatpush1.msra.mxu0 %v773
          %775 = vmatprep.subr.mxu0 0.0
          %v776 = vand.u32 %v479, 4294901760
          %777 = vmatpush1.msra.mxu0 %v776
          %778 = vmatprep.subr.mxu0 0.0
          %v779 = vand.u32 %v480, 4294901760
          %780 = vmatpush1.msra.mxu0 %v779
          %781 = vmatprep.subr.mxu0 0.0
          %v782 = vand.u32 %v481, 4294901760
          %783 = vmatpush1.msra.mxu0 %v782
          %784 = vmatprep.subr.mxu0 0.0
          %v785 = vand.u32 %v482, 4294901760
          %786 = vmatpush1.msra.mxu0 %v785
          %787 = vmatprep.subr.mxu0 0.0
          %v788 = vand.u32 %v483, 4294901760
          %789 = vmatpush1.msra.mxu0 %v788
          %790 = vmatprep.subr.mxu0 0.0
          %v791 = vand.u32 %v484, 4294901760
          %792 = vmatpush1.msra.mxu0 %v791
          %793 = vmatprep.subr.mxu0 0.0
          %v794 = vand.u32 %v485, 4294901760
          %795 = vmatpush1.msra.mxu0 %v794
          %796 = vmatprep.subr.mxu0 0.0
          %797 = vmatpush1.msra.mxu0 0.0
          %798 = vmatprep.subr.mxu0 0.0
          %799 = vmatpush1.msra.mxu0 0.0
          %800 = vmatprep.subr.mxu0 0.0
          %801 = vmatpush1.msra.mxu0 0.0
          %802 = vmatprep.subr.mxu0 0.0
          %803 = vmatpush1.msra.mxu0 0.0
          %804 = vmatprep.subr.mxu0 0.0
          %805 = vmatpush1.msra.mxu0 0.0
          %806 = vmatprep.subr.mxu0 0.0
          %807 = vmatpush1.msra.mxu0 0.0
          %808 = vmatprep.subr.mxu0 0.0
          %809 = vmatpush1.msra.mxu0 0.0
          %810 = vmatprep.subr.mxu0 0.0
          %811 = vmatpush1.msra.mxu0 0.0
          %812 = vmatprep.subr.mxu0 0.0
          %813 = vmatpush1.msra.mxu0 0.0
          %814 = vmatprep.subr.mxu0 0.0
          %815 = vmatpush1.msra.mxu0 0.0
          %816 = vmatprep.subr.mxu0 0.0
          %817 = vmatpush1.msra.mxu0 0.0
          %818 = vmatprep.subr.mxu0 0.0
          %819 = vmatpush1.msra.mxu0 0.0
          %820 = vmatprep.subr.mxu0 0.0
          %821 = vmatpush1.msra.mxu0 0.0
          %822 = vmatprep.subr.mxu0 0.0
          %823 = vmatpush1.msra.mxu0 0.0
          %824 = vmatprep.subr.mxu0 0.0
          %825 = vmatpush1.msra.mxu0 0.0
          %826 = vmatprep.subr.mxu0 0.0
          %827 = vmatpush1.msra.mxu0 0.0
          %828 = vmatprep.subr.mxu0 0.0
          %829 = vmatpush1.msra.mxu0 0.0
          %830 = vmatprep.subr.mxu0 0.0
          %831 = vmatpush1.msra.mxu0 0.0
          %832 = vmatprep.subr.mxu0 0.0
          %833 = vmatpush1.msra.mxu0 0.0
          %834 = vmatprep.subr.mxu0 0.0
          %835 = vmatpush1.msra.mxu0 0.0
          %836 = vmatprep.subr.mxu0 0.0
          %837 = vmatpush1.msra.mxu0 0.0
          %838 = vmatprep.subr.mxu0 0.0
          %839 = vmatpush1.msra.mxu0 0.0
          %840 = vmatprep.subr.mxu0 0.0
          %841 = vmatpush1.msra.mxu0 0.0
          %842 = vmatprep.subr.mxu0 0.0
          %843 = vmatpush1.msra.mxu0 0.0
          %844 = vmatprep.mubr.f32.mxu0 0.0
          %v845 = vand.u32 %v488, 4294901760
          %v846 = vsub.f32 %v488, %v845
          %v847 = vand.u32 %v846, 4294901760
          %848 = vmatmul.mubr.f32.gmra.mrb[0].mxu0 %v847
          %v849 = vpop.f32.mrb[0].mxu0
          %v850 = vadd.f32 %v769, %v849
          %v851 = vpop.f32.mrb[0].mxu0
          %852 = vdwg.mxu0
          %853 = vmatprep.subr.mxu0 0.0
          %v854 = vand.u32 %v478, 4294901760
          %v855 = vsub.f32 %v478, %v854
          %v856 = vand.u32 %v855, 4294901760
          %857 = vmatpush1.msra.mxu0 %v856
          %858 = vmatprep.subr.mxu0 0.0
          %v859 = vand.u32 %v479, 4294901760
          %v860 = vsub.f32 %v479, %v859
          %v861 = vand.u32 %v860, 4294901760
          %862 = vmatpush1.msra.mxu0 %v861
          %863 = vmatprep.subr.mxu0 0.0
          %v864 = vand.u32 %v480, 4294901760
          %v865 = vsub.f32 %v480, %v864
          %v866 = vand.u32 %v865, 4294901760
          %867 = vmatpush1.msra.mxu0 %v866
          %868 = vmatprep.subr.mxu0 0.0
          %v869 = vand.u32 %v481, 4294901760
          %v870 = vsub.f32 %v481, %v869
          %v871 = vand.u32 %v870, 4294901760
          %872 = vmatpush1.msra.mxu0 %v871
          %873 = vmatprep.subr.mxu0 0.0
          %v874 = vand.u32 %v482, 4294901760
          %v875 = vsub.f32 %v482, %v874
          %v876 = vand.u32 %v875, 4294901760
          %877 = vmatpush1.msra.mxu0 %v876
          %878 = vmatprep.subr.mxu0 0.0
          %v879 = vand.u32 %v483, 4294901760
          %v880 = vsub.f32 %v483, %v879
          %v881 = vand.u32 %v880, 4294901760
          %882 = vmatpush1.msra.mxu0 %v881
          %883 = vmatprep.subr.mxu0 0.0
          %v884 = vand.u32 %v484, 4294901760
          %v885 = vsub.f32 %v484, %v884
          %v886 = vand.u32 %v885, 4294901760
          %887 = vmatpush1.msra.mxu0 %v886
          %888 = vmatprep.subr.mxu0 0.0
          %v889 = vand.u32 %v485, 4294901760
          %v890 = vsub.f32 %v485, %v889
          %v891 = vand.u32 %v890, 4294901760
          %892 = vmatpush1.msra.mxu0 %v891
          %893 = vmatprep.subr.mxu0 0.0
          %894 = vmatpush1.msra.mxu0 0.0
          %895 = vmatprep.subr.mxu0 0.0
          %896 = vmatpush1.msra.mxu0 0.0
          %897 = vmatprep.subr.mxu0 0.0
          %898 = vmatpush1.msra.mxu0 0.0
          %899 = vmatprep.subr.mxu0 0.0
          %900 = vmatpush1.msra.mxu0 0.0
          %901 = vmatprep.subr.mxu0 0.0
          %902 = vmatpush1.msra.mxu0 0.0
          %903 = vmatprep.subr.mxu0 0.0
          %904 = vmatpush1.msra.mxu0 0.0
          %905 = vmatprep.subr.mxu0 0.0
          %906 = vmatpush1.msra.mxu0 0.0
          %907 = vmatprep.subr.mxu0 0.0
          %908 = vmatpush1.msra.mxu0 0.0
          %909 = vmatprep.subr.mxu0 0.0
          %910 = vmatpush1.msra.mxu0 0.0
          %911 = vmatprep.subr.mxu0 0.0
          %912 = vmatpush1.msra.mxu0 0.0
          %913 = vmatprep.subr.mxu0 0.0
          %914 = vmatpush1.msra.mxu0 0.0
          %915 = vmatprep.subr.mxu0 0.0
          %916 = vmatpush1.msra.mxu0 0.0
          %917 = vmatprep.subr.mxu0 0.0
          %918 = vmatpush1.msra.mxu0 0.0
          %919 = vmatprep.subr.mxu0 0.0
          %920 = vmatpush1.msra.mxu0 0.0
          %921 = vmatprep.subr.mxu0 0.0
          %922 = vmatpush1.msra.mxu0 0.0
          %923 = vmatprep.subr.mxu0 0.0
          %924 = vmatpush1.msra.mxu0 0.0
          %925 = vmatprep.subr.mxu0 0.0
          %926 = vmatpush1.msra.mxu0 0.0
          %927 = vmatprep.subr.mxu0 0.0
          %928 = vmatpush1.msra.mxu0 0.0
          %929 = vmatprep.subr.mxu0 0.0
          %930 = vmatpush1.msra.mxu0 0.0
          %931 = vmatprep.subr.mxu0 0.0
          %932 = vmatpush1.msra.mxu0 0.0
          %933 = vmatprep.subr.mxu0 0.0
          %934 = vmatpush1.msra.mxu0 0.0
          %935 = vmatprep.subr.mxu0 0.0
          %936 = vmatpush1.msra.mxu0 0.0
          %937 = vmatprep.subr.mxu0 0.0
          %938 = vmatpush1.msra.mxu0 0.0
          %939 = vmatprep.subr.mxu0 0.0
          %940 = vmatpush1.msra.mxu0 0.0
          %941 = vmatprep.mubr.f32.mxu0 0.0
          %v942 = vand.u32 %v488, 4294901760
          %943 = vmatmul.mubr.f32.gmra.mrb[0].mxu0 %v942
          %v944 = vpop.f32.mrb[0].mxu0
          %v945 = vadd.f32 %v850, %v944
          %v946 = vpop.f32.mrb[0].mxu0
          %947 = vdwg.mxu0
          %948 = vmatprep.subr.mxu0 0.0
          %v949 = vand.u32 %v478, 4294901760
          %950 = vmatpush1.msra.mxu0 %v949
          %951 = vmatprep.subr.mxu0 0.0
          %v952 = vand.u32 %v479, 4294901760
          %953 = vmatpush1.msra.mxu0 %v952
          %954 = vmatprep.subr.mxu0 0.0
          %v955 = vand.u32 %v480, 4294901760
          %956 = vmatpush1.msra.mxu0 %v955
          %957 = vmatprep.subr.mxu0 0.0
          %v958 = vand.u32 %v481, 4294901760
          %959 = vmatpush1.msra.mxu0 %v958
          %960 = vmatprep.subr.mxu0 0.0
          %v961 = vand.u32 %v482, 4294901760
          %962 = vmatpush1.msra.mxu0 %v961
          %963 = vmatprep.subr.mxu0 0.0
          %v964 = vand.u32 %v483, 4294901760
          %965 = vmatpush1.msra.mxu0 %v964
          %966 = vmatprep.subr.mxu0 0.0
          %v967 = vand.u32 %v484, 4294901760
          %968 = vmatpush1.msra.mxu0 %v967
          %969 = vmatprep.subr.mxu0 0.0
          %v970 = vand.u32 %v485, 4294901760
          %971 = vmatpush1.msra.mxu0 %v970
          %972 = vmatprep.subr.mxu0 0.0
          %973 = vmatpush1.msra.mxu0 0.0
          %974 = vmatprep.subr.mxu0 0.0
          %975 = vmatpush1.msra.mxu0 0.0
          %976 = vmatprep.subr.mxu0 0.0
          %977 = vmatpush1.msra.mxu0 0.0
          %978 = vmatprep.subr.mxu0 0.0
          %979 = vmatpush1.msra.mxu0 0.0
          %980 = vmatprep.subr.mxu0 0.0
          %981 = vmatpush1.msra.mxu0 0.0
          %982 = vmatprep.subr.mxu0 0.0
          %983 = vmatpush1.msra.mxu0 0.0
          %984 = vmatprep.subr.mxu0 0.0
          %985 = vmatpush1.msra.mxu0 0.0
          %986 = vmatprep.subr.mxu0 0.0
          %987 = vmatpush1.msra.mxu0 0.0
          %988 = vmatprep.subr.mxu0 0.0
          %989 = vmatpush1.msra.mxu0 0.0
          %990 = vmatprep.subr.mxu0 0.0
          %991 = vmatpush1.msra.mxu0 0.0
          %992 = vmatprep.subr.mxu0 0.0
          %993 = vmatpush1.msra.mxu0 0.0
          %994 = vmatprep.subr.mxu0 0.0
          %995 = vmatpush1.msra.mxu0 0.0
          %996 = vmatprep.subr.mxu0 0.0
          %997 = vmatpush1.msra.mxu0 0.0
          %998 = vmatprep.subr.mxu0 0.0
          %999 = vmatpush1.msra.mxu0 0.0
          %1000 = vmatprep.subr.mxu0 0.0
          %1001 = vmatpush1.msra.mxu0 0.0
          %1002 = vmatprep.subr.mxu0 0.0
          %1003 = vmatpush1.msra.mxu0 0.0
          %1004 = vmatprep.subr.mxu0 0.0
          %1005 = vmatpush1.msra.mxu0 0.0
          %1006 = vmatprep.subr.mxu0 0.0
          %1007 = vmatpush1.msra.mxu0 0.0
          %1008 = vmatprep.subr.mxu0 0.0
          %1009 = vmatpush1.msra.mxu0 0.0
          %1010 = vmatprep.subr.mxu0 0.0
          %1011 = vmatpush1.msra.mxu0 0.0
          %1012 = vmatprep.subr.mxu0 0.0
          %1013 = vmatpush1.msra.mxu0 0.0
          %1014 = vmatprep.subr.mxu0 0.0
          %1015 = vmatpush1.msra.mxu0 0.0
          %1016 = vmatprep.subr.mxu0 0.0
          %1017 = vmatpush1.msra.mxu0 0.0
          %1018 = vmatprep.subr.mxu0 0.0
          %1019 = vmatpush1.msra.mxu0 0.0
          %1020 = vmatprep.mubr.f32.mxu0 0.0
          %v1021 = vand.u32 %v488, 4294901760
          %1022 = vmatmul.mubr.f32.gmra.mrb[0].mxu0 %v1021
          %v1023 = vpop.f32.mrb[0].mxu0
          %v1024 = vadd.f32 %v945, %v1023
          %v1025 = vpop.f32.mrb[0].mxu0
          %1026 = vdwg.mxu0
          %v1027 = vmax.f32 %v1024, 0.0
          %v1029 = vrot.slane %v1027, 1
          %v1031 = vadd.f32 %v1027, %v1029
          %v1032 = vld [vmem:[%s2] sm:$0xf]
          %vm1033 = vcmask 31744
          %v1035 = vsel %vm1033, %v1031, 0
          %vm1037 = vcmask 1043456
          %v1039 = vsel %vm1037, %v1032, 0
          %1041 = vmatprep.subr.mxu0 0.0
          %v1042 = vand.u32 %v1039, 4294901760
          %1043 = vmatpush1.msra.mxu0 %v1042
          %1044 = vmatprep.subr.mxu0 0.0
          %1045 = vmatpush1.msra.mxu0 0.0
          %1046 = vmatprep.subr.mxu0 0.0
          %1047 = vmatpush1.msra.mxu0 0.0
          %1048 = vmatprep.subr.mxu0 0.0
          %1049 = vmatpush1.msra.mxu0 0.0
          %1050 = vmatprep.subr.mxu0 0.0
          %1051 = vmatpush1.msra.mxu0 0.0
          %1052 = vmatprep.subr.mxu0 0.0
          %1053 = vmatpush1.msra.mxu0 0.0
          %1054 = vmatprep.subr.mxu0 0.0
          %1055 = vmatpush1.msra.mxu0 0.0
          %1056 = vmatprep.subr.mxu0 0.0
          %1057 = vmatpush1.msra.mxu0 0.0
          %1058 = vmatprep.subr.mxu0 0.0
          %1059 = vmatpush1.msra.mxu0 0.0
          %1060 = vmatprep.subr.mxu0 0.0
          %1061 = vmatpush1.msra.mxu0 0.0
          %1062 = vmatprep.subr.mxu0 0.0
          %1063 = vmatpush1.msra.mxu0 0.0
          %1064 = vmatprep.subr.mxu0 0.0
          %1065 = vmatpush1.msra.mxu0 0.0
          %1066 = vmatprep.subr.mxu0 0.0
          %1067 = vmatpush1.msra.mxu0 0.0
          %1068 = vmatprep.subr.mxu0 0.0
          %1069 = vmatpush1.msra.mxu0 0.0
          %1070 = vmatprep.subr.mxu0 0.0
          %1071 = vmatpush1.msra.mxu0 0.0
          %1072 = vmatprep.subr.mxu0 0.0
          %1073 = vmatpush1.msra.mxu0 0.0
          %1074 = vmatprep.subr.mxu0 0.0
          %1075 = vmatpush1.msra.mxu0 0.0
          %1076 = vmatprep.subr.mxu0 0.0
          %1077 = vmatpush1.msra.mxu0 0.0
          %1078 = vmatprep.subr.mxu0 0.0
          %1079 = vmatpush1.msra.mxu0 0.0
          %1080 = vmatprep.subr.mxu0 0.0
          %1081 = vmatpush1.msra.mxu0 0.0
          %1082 = vmatprep.subr.mxu0 0.0
          %1083 = vmatpush1.msra.mxu0 0.0
          %1084 = vmatprep.subr.mxu0 0.0
          %1085 = vmatpush1.msra.mxu0 0.0
          %1086 = vmatprep.subr.mxu0 0.0
          %1087 = vmatpush1.msra.mxu0 0.0
          %1088 = vmatprep.subr.mxu0 0.0
          %1089 = vmatpush1.msra.mxu0 0.0
          %1090 = vmatprep.subr.mxu0 0.0
          %1091 = vmatpush1.msra.mxu0 0.0
          %1092 = vmatprep.subr.mxu0 0.0
          %1093 = vmatpush1.msra.mxu0 0.0
          %1094 = vmatprep.subr.mxu0 0.0
          %1095 = vmatpush1.msra.mxu0 0.0
          %1096 = vmatprep.subr.mxu0 0.0
          %1097 = vmatpush1.msra.mxu0 0.0
          %1098 = vmatprep.subr.mxu0 0.0
          %1099 = vmatpush1.msra.mxu0 0.0
          %1100 = vmatprep.subr.mxu0 0.0
          %1101 = vmatpush1.msra.mxu0 0.0
          %1102 = vmatprep.subr.mxu0 0.0
          %1103 = vmatpush1.msra.mxu0 0.0
          %1104 = vmatprep.subr.mxu0 0.0
          %1105 = vmatpush1.msra.mxu0 0.0
          %1106 = vmatprep.mubr.f32.mxu0 0.0
          %v1107 = vand.u32 %v1035, 4294901760
          %v1108 = vsub.f32 %v1035, %v1107
          %v1109 = vand.u32 %v1108, 4294901760
          %v1110 = vsub.f32 %v1108, %v1109
          %v1111 = vand.u32 %v1110, 4294901760
          %1112 = vmatmul.mubr.f32.gmra.mrb[0].mxu0 %v1111
          %v1113 = vpop.f32.mrb[0].mxu0
          %v1114 = vadd.f32 0.0, %v1113
          %v1115 = vpop.f32.mrb[0].mxu0
          %1116 = vdwg.mxu0
          %1117 = vmatprep.subr.mxu0 0.0
          %v1118 = vand.u32 %v1039, 4294901760
          %v1119 = vsub.f32 %v1039, %v1118
          %v1120 = vand.u32 %v1119, 4294901760
          %v1121 = vsub.f32 %v1119, %v1120
          %v1122 = vand.u32 %v1121, 4294901760
          %1123 = vmatpush1.msra.mxu0 %v1122
          %1124 = vmatprep.subr.mxu0 0.0
          %1125 = vmatpush1.msra.mxu0 0.0
          %1126 = vmatprep.subr.mxu0 0.0
          %1127 = vmatpush1.msra.mxu0 0.0
          %1128 = vmatprep.subr.mxu0 0.0
          %1129 = vmatpush1.msra.mxu0 0.0
          %1130 = vmatprep.subr.mxu0 0.0
          %1131 = vmatpush1.msra.mxu0 0.0
          %1132 = vmatprep.subr.mxu0 0.0
          %1133 = vmatpush1.msra.mxu0 0.0
          %1134 = vmatprep.subr.mxu0 0.0
          %1135 = vmatpush1.msra.mxu0 0.0
          %1136 = vmatprep.subr.mxu0 0.0
          %1137 = vmatpush1.msra.mxu0 0.0
          %1138 = vmatprep.subr.mxu0 0.0
          %1139 = vmatpush1.msra.mxu0 0.0
          %1140 = vmatprep.subr.mxu0 0.0
          %1141 = vmatpush1.msra.mxu0 0.0
          %1142 = vmatprep.subr.mxu0 0.0
          %1143 = vmatpush1.msra.mxu0 0.0
          %1144 = vmatprep.subr.mxu0 0.0
          %1145 = vmatpush1.msra.mxu0 0.0
          %1146 = vmatprep.subr.mxu0 0.0
          %1147 = vmatpush1.msra.mxu0 0.0
          %1148 = vmatprep.subr.mxu0 0.0
          %1149 = vmatpush1.msra.mxu0 0.0
          %1150 = vmatprep.subr.mxu0 0.0
          %1151 = vmatpush1.msra.mxu0 0.0
          %1152 = vmatprep.subr.mxu0 0.0
          %1153 = vmatpush1.msra.mxu0 0.0
          %1154 = vmatprep.subr.mxu0 0.0
          %1155 = vmatpush1.msra.mxu0 0.0
          %1156 = vmatprep.subr.mxu0 0.0
          %1157 = vmatpush1.msra.mxu0 0.0
          %1158 = vmatprep.subr.mxu0 0.0
          %1159 = vmatpush1.msra.mxu0 0.0
          %1160 = vmatprep.subr.mxu0 0.0
          %1161 = vmatpush1.msra.mxu0 0.0
          %1162 = vmatprep.subr.mxu0 0.0
          %1163 = vmatpush1.msra.mxu0 0.0
          %1164 = vmatprep.subr.mxu0 0.0
          %1165 = vmatpush1.msra.mxu0 0.0
          %1166 = vmatprep.subr.mxu0 0.0
          %1167 = vmatpush1.msra.mxu0 0.0
          %1168 = vmatprep.subr.mxu0 0.0
          %1169 = vmatpush1.msra.mxu0 0.0
          %1170 = vmatprep.subr.mxu0 0.0
          %1171 = vmatpush1.msra.mxu0 0.0
          %1172 = vmatprep.subr.mxu0 0.0
          %1173 = vmatpush1.msra.mxu0 0.0
          %1174 = vmatprep.subr.mxu0 0.0
          %1175 = vmatpush1.msra.mxu0 0.0
          %1176 = vmatprep.subr.mxu0 0.0
          %1177 = vmatpush1.msra.mxu0 0.0
          %1178 = vmatprep.subr.mxu0 0.0
          %1179 = vmatpush1.msra.mxu0 0.0
          %1180 = vmatprep.subr.mxu0 0.0
          %1181 = vmatpush1.msra.mxu0 0.0
          %1182 = vmatprep.subr.mxu0 0.0
          %1183 = vmatpush1.msra.mxu0 0.0
          %1184 = vmatprep.subr.mxu0 0.0
          %1185 = vmatpush1.msra.mxu0 0.0
          %1186 = vmatprep.mubr.f32.mxu0 0.0
          %v1187 = vand.u32 %v1035, 4294901760
          %1188 = vmatmul.mubr.f32.gmra.mrb[0].mxu0 %v1187
          %v1189 = vpop.f32.mrb[0].mxu0
          %v1190 = vadd.f32 %v1114, %v1189
          %v1191 = vpop.f32.mrb[0].mxu0
          %1192 = vdwg.mxu0
          %1193 = vmatprep.subr.mxu0 0.0
          %v1194 = vand.u32 %v1039, 4294901760
          %v1195 = vsub.f32 %v1039, %v1194
          %1196 = vmatpush1.msra.mxu0 %v1195
          %1197 = vmatprep.subr.mxu0 0.0
          %1198 = vmatpush1.msra.mxu0 0.0
          %1199 = vmatprep.subr.mxu0 0.0
          %1200 = vmatpush1.msra.mxu0 0.0
          %1201 = vmatprep.subr.mxu0 0.0
          %1202 = vmatpush1.msra.mxu0 0.0
          %1203 = vmatprep.subr.mxu0 0.0
          %1204 = vmatpush1.msra.mxu0 0.0
          %1205 = vmatprep.subr.mxu0 0.0
          %1206 = vmatpush1.msra.mxu0 0.0
          %1207 = vmatprep.subr.mxu0 0.0
          %1208 = vmatpush1.msra.mxu0 0.0
          %1209 = vmatprep.subr.mxu0 0.0
          %1210 = vmatpush1.msra.mxu0 0.0
          %1211 = vmatprep.subr.mxu0 0.0
          %1212 = vmatpush1.msra.mxu0 0.0
          %1213 = vmatprep.subr.mxu0 0.0
          %1214 = vmatpush1.msra.mxu0 0.0
          %1215 = vmatprep.subr.mxu0 0.0
          %1216 = vmatpush1.msra.mxu0 0.0
          %1217 = vmatprep.subr.mxu0 0.0
          %1218 = vmatpush1.msra.mxu0 0.0
          %1219 = vmatprep.subr.mxu0 0.0
          %1220 = vmatpush1.msra.mxu0 0.0
          %1221 = vmatprep.subr.mxu0 0.0
          %1222 = vmatpush1.msra.mxu0 0.0
          %1223 = vmatprep.subr.mxu0 0.0
          %1224 = vmatpush1.msra.mxu0 0.0
          %1225 = vmatprep.subr.mxu0 0.0
          %1226 = vmatpush1.msra.mxu0 0.0
          %1227 = vmatprep.subr.mxu0 0.0
          %1228 = vmatpush1.msra.mxu0 0.0
          %1229 = vmatprep.subr.mxu0 0.0
          %1230 = vmatpush1.msra.mxu0 0.0
          %1231 = vmatprep.subr.mxu0 0.0
          %1232 = vmatpush1.msra.mxu0 0.0
          %1233 = vmatprep.subr.mxu0 0.0
          %1234 = vmatpush1.msra.mxu0 0.0
          %1235 = vmatprep.subr.mxu0 0.0
          %1236 = vmatpush1.msra.mxu0 0.0
          %1237 = vmatprep.subr.mxu0 0.0
          %1238 = vmatpush1.msra.mxu0 0.0
          %1239 = vmatprep.subr.mxu0 0.0
          %1240 = vmatpush1.msra.mxu0 0.0
          %1241 = vmatprep.subr.mxu0 0.0
          %1242 = vmatpush1.msra.mxu0 0.0
          %1243 = vmatprep.subr.mxu0 0.0
          %1244 = vmatpush1.msra.mxu0 0.0
          %1245 = vmatprep.subr.mxu0 0.0
          %1246 = vmatpush1.msra.mxu0 0.0
          %1247 = vmatprep.subr.mxu0 0.0
          %1248 = vmatpush1.msra.mxu0 0.0
          %1249 = vmatprep.subr.mxu0 0.0
          %1250 = vmatpush1.msra.mxu0 0.0
          %1251 = vmatprep.subr.mxu0 0.0
          %1252 = vmatpush1.msra.mxu0 0.0
          %1253 = vmatprep.subr.mxu0 0.0
          %1254 = vmatpush1.msra.mxu0 0.0
          %1255 = vmatprep.subr.mxu0 0.0
          %1256 = vmatpush1.msra.mxu0 0.0
          %1257 = vmatprep.subr.mxu0 0.0
          %1258 = vmatpush1.msra.mxu0 0.0
          %1259 = vmatprep.mubr.f32.mxu0 0.0
          %v1260 = vand.u32 %v1035, 4294901760
          %v1261 = vsub.f32 %v1035, %v1260
          %1262 = vmatmul.mubr.f32.gmra.mrb[0].mxu0 %v1261
          %v1263 = vpop.f32.mrb[0].mxu0
          %v1264 = vadd.f32 %v1190, %v1263
          %v1265 = vpop.f32.mrb[0].mxu0
          %1266 = vdwg.mxu0
          %1267 = vmatprep.subr.mxu0 0.0
          %v1268 = vand.u32 %v1039, 4294901760
          %1269 = vmatpush1.msra.mxu0 %v1268
          %1270 = vmatprep.subr.mxu0 0.0
          %1271 = vmatpush1.msra.mxu0 0.0
          %1272 = vmatprep.subr.mxu0 0.0
          %1273 = vmatpush1.msra.mxu0 0.0
          %1274 = vmatprep.subr.mxu0 0.0
          %1275 = vmatpush1.msra.mxu0 0.0
          %1276 = vmatprep.subr.mxu0 0.0
          %1277 = vmatpush1.msra.mxu0 0.0
          %1278 = vmatprep.subr.mxu0 0.0
          %1279 = vmatpush1.msra.mxu0 0.0
          %1280 = vmatprep.subr.mxu0 0.0
          %1281 = vmatpush1.msra.mxu0 0.0
          %1282 = vmatprep.subr.mxu0 0.0
          %1283 = vmatpush1.msra.mxu0 0.0
          %1284 = vmatprep.subr.mxu0 0.0
          %1285 = vmatpush1.msra.mxu0 0.0
          %1286 = vmatprep.subr.mxu0 0.0
          %1287 = vmatpush1.msra.mxu0 0.0
          %1288 = vmatprep.subr.mxu0 0.0
          %1289 = vmatpush1.msra.mxu0 0.0
          %1290 = vmatprep.subr.mxu0 0.0
          %1291 = vmatpush1.msra.mxu0 0.0
          %1292 = vmatprep.subr.mxu0 0.0
          %1293 = vmatpush1.msra.mxu0 0.0
          %1294 = vmatprep.subr.mxu0 0.0
          %1295 = vmatpush1.msra.mxu0 0.0
          %1296 = vmatprep.subr.mxu0 0.0
          %1297 = vmatpush1.msra.mxu0 0.0
          %1298 = vmatprep.subr.mxu0 0.0
          %1299 = vmatpush1.msra.mxu0 0.0
          %1300 = vmatprep.subr.mxu0 0.0
          %1301 = vmatpush1.msra.mxu0 0.0
          %1302 = vmatprep.subr.mxu0 0.0
          %1303 = vmatpush1.msra.mxu0 0.0
          %1304 = vmatprep.subr.mxu0 0.0
          %1305 = vmatpush1.msra.mxu0 0.0
          %1306 = vmatprep.subr.mxu0 0.0
          %1307 = vmatpush1.msra.mxu0 0.0
          %1308 = vmatprep.subr.mxu0 0.0
          %1309 = vmatpush1.msra.mxu0 0.0
          %1310 = vmatprep.subr.mxu0 0.0
          %1311 = vmatpush1.msra.mxu0 0.0
          %1312 = vmatprep.subr.mxu0 0.0
          %1313 = vmatpush1.msra.mxu0 0.0
          %1314 = vmatprep.subr.mxu0 0.0
          %1315 = vmatpush1.msra.mxu0 0.0
          %1316 = vmatprep.subr.mxu0 0.0
          %1317 = vmatpush1.msra.mxu0 0.0
          %1318 = vmatprep.subr.mxu0 0.0
          %1319 = vmatpush1.msra.mxu0 0.0
          %1320 = vmatprep.subr.mxu0 0.0
          %1321 = vmatpush1.msra.mxu0 0.0
          %1322 = vmatprep.subr.mxu0 0.0
          %1323 = vmatpush1.msra.mxu0 0.0
          %1324 = vmatprep.subr.mxu0 0.0
          %1325 = vmatpush1.msra.mxu0 0.0
          %1326 = vmatprep.subr.mxu0 0.0
          %1327 = vmatpush1.msra.mxu0 0.0
          %1328 = vmatprep.subr.mxu0 0.0
          %1329 = vmatpush1.msra.mxu0 0.0
          %1330 = vmatprep.subr.mxu0 0.0
          %1331 = vmatpush1.msra.mxu0 0.0
          %1332 = vmatprep.mubr.f32.mxu0 0.0
          %v1333 = vand.u32 %v1035, 4294901760
          %v1334 = vsub.f32 %v1035, %v1333
          %v1335 = vand.u32 %v1334, 4294901760
          %1336 = vmatmul.mubr.f32.gmra.mrb[0].mxu0 %v1335
          %v1337 = vpop.f32.mrb[0].mxu0
          %v1338 = vadd.f32 %v1264, %v1337
          %v1339 = vpop.f32.mrb[0].mxu0
          %1340 = vdwg.mxu0
          %1341 = vmatprep.subr.mxu0 0.0
          %v1342 = vand.u32 %v1039, 4294901760
          %v1343 = vsub.f32 %v1039, %v1342
          %v1344 = vand.u32 %v1343, 4294901760
          %1345 = vmatpush1.msra.mxu0 %v1344
          %1346 = vmatprep.subr.mxu0 0.0
          %1347 = vmatpush1.msra.mxu0 0.0
          %1348 = vmatprep.subr.mxu0 0.0
          %1349 = vmatpush1.msra.mxu0 0.0
          %1350 = vmatprep.subr.mxu0 0.0
          %1351 = vmatpush1.msra.mxu0 0.0
          %1352 = vmatprep.subr.mxu0 0.0
          %1353 = vmatpush1.msra.mxu0 0.0
          %1354 = vmatprep.subr.mxu0 0.0
          %1355 = vmatpush1.msra.mxu0 0.0
          %1356 = vmatprep.subr.mxu0 0.0
          %1357 = vmatpush1.msra.mxu0 0.0
          %1358 = vmatprep.subr.mxu0 0.0
          %1359 = vmatpush1.msra.mxu0 0.0
          %1360 = vmatprep.subr.mxu0 0.0
          %1361 = vmatpush1.msra.mxu0 0.0
          %1362 = vmatprep.subr.mxu0 0.0
          %1363 = vmatpush1.msra.mxu0 0.0
          %1364 = vmatprep.subr.mxu0 0.0
          %1365 = vmatpush1.msra.mxu0 0.0
          %1366 = vmatprep.subr.mxu0 0.0
          %1367 = vmatpush1.msra.mxu0 0.0
          %1368 = vmatprep.subr.mxu0 0.0
          %1369 = vmatpush1.msra.mxu0 0.0
          %1370 = vmatprep.subr.mxu0 0.0
          %1371 = vmatpush1.msra.mxu0 0.0
          %1372 = vmatprep.subr.mxu0 0.0
          %1373 = vmatpush1.msra.mxu0 0.0
          %1374 = vmatprep.subr.mxu0 0.0
          %1375 = vmatpush1.msra.mxu0 0.0
          %1376 = vmatprep.subr.mxu0 0.0
          %1377 = vmatpush1.msra.mxu0 0.0
          %1378 = vmatprep.subr.mxu0 0.0
          %1379 = vmatpush1.msra.mxu0 0.0
          %1380 = vmatprep.subr.mxu0 0.0
          %1381 = vmatpush1.msra.mxu0 0.0
          %1382 = vmatprep.subr.mxu0 0.0
          %1383 = vmatpush1.msra.mxu0 0.0
          %1384 = vmatprep.subr.mxu0 0.0
          %1385 = vmatpush1.msra.mxu0 0.0
          %1386 = vmatprep.subr.mxu0 0.0
          %1387 = vmatpush1.msra.mxu0 0.0
          %1388 = vmatprep.subr.mxu0 0.0
          %1389 = vmatpush1.msra.mxu0 0.0
          %1390 = vmatprep.subr.mxu0 0.0
          %1391 = vmatpush1.msra.mxu0 0.0
          %1392 = vmatprep.subr.mxu0 0.0
          %1393 = vmatpush1.msra.mxu0 0.0
          %1394 = vmatprep.subr.mxu0 0.0
          %1395 = vmatpush1.msra.mxu0 0.0
          %1396 = vmatprep.subr.mxu0 0.0
          %1397 = vmatpush1.msra.mxu0 0.0
          %1398 = vmatprep.subr.mxu0 0.0
          %1399 = vmatpush1.msra.mxu0 0.0
          %1400 = vmatprep.subr.mxu0 0.0
          %1401 = vmatpush1.msra.mxu0 0.0
          %1402 = vmatprep.subr.mxu0 0.0
          %1403 = vmatpush1.msra.mxu0 0.0
          %1404 = vmatprep.subr.mxu0 0.0
          %1405 = vmatpush1.msra.mxu0 0.0
          %1406 = vmatprep.subr.mxu0 0.0
          %1407 = vmatpush1.msra.mxu0 0.0
          %1408 = vmatprep.mubr.f32.mxu0 0.0
          %v1409 = vand.u32 %v1035, 4294901760
          %1410 = vmatmul.mubr.f32.gmra.mrb[0].mxu0 %v1409
          %v1411 = vpop.f32.mrb[0].mxu0
          %v1412 = vadd.f32 %v1338, %v1411
          %v1413 = vpop.f32.mrb[0].mxu0
          %1414 = vdwg.mxu0
          %1415 = vmatprep.subr.mxu0 0.0
          %v1416 = vand.u32 %v1039, 4294901760
          %1417 = vmatpush1.msra.mxu0 %v1416
          %1418 = vmatprep.subr.mxu0 0.0
          %1419 = vmatpush1.msra.mxu0 0.0
          %1420 = vmatprep.subr.mxu0 0.0
          %1421 = vmatpush1.msra.mxu0 0.0
          %1422 = vmatprep.subr.mxu0 0.0
          %1423 = vmatpush1.msra.mxu0 0.0
          %1424 = vmatprep.subr.mxu0 0.0
          %1425 = vmatpush1.msra.mxu0 0.0
          %1426 = vmatprep.subr.mxu0 0.0
          %1427 = vmatpush1.msra.mxu0 0.0
          %1428 = vmatprep.subr.mxu0 0.0
          %1429 = vmatpush1.msra.mxu0 0.0
          %1430 = vmatprep.subr.mxu0 0.0
          %1431 = vmatpush1.msra.mxu0 0.0
          %1432 = vmatprep.subr.mxu0 0.0
          %1433 = vmatpush1.msra.mxu0 0.0
          %1434 = vmatprep.subr.mxu0 0.0
          %1435 = vmatpush1.msra.mxu0 0.0
          %1436 = vmatprep.subr.mxu0 0.0
          %1437 = vmatpush1.msra.mxu0 0.0
          %1438 = vmatprep.subr.mxu0 0.0
          %1439 = vmatpush1.msra.mxu0 0.0
          %1440 = vmatprep.subr.mxu0 0.0
          %1441 = vmatpush1.msra.mxu0 0.0
          %1442 = vmatprep.subr.mxu0 0.0
          %1443 = vmatpush1.msra.mxu0 0.0
          %1444 = vmatprep.subr.mxu0 0.0
          %1445 = vmatpush1.msra.mxu0 0.0
          %1446 = vmatprep.subr.mxu0 0.0
          %1447 = vmatpush1.msra.mxu0 0.0
          %1448 = vmatprep.subr.mxu0 0.0
          %1449 = vmatpush1.msra.mxu0 0.0
          %1450 = vmatprep.subr.mxu0 0.0
          %1451 = vmatpush1.msra.mxu0 0.0
          %1452 = vmatprep.subr.mxu0 0.0
          %1453 = vmatpush1.msra.mxu0 0.0
          %1454 = vmatprep.subr.mxu0 0.0
          %1455 = vmatpush1.msra.mxu0 0.0
          %1456 = vmatprep.subr.mxu0 0.0
          %1457 = vmatpush1.msra.mxu0 0.0
          %1458 = vmatprep.subr.mxu0 0.0
          %1459 = vmatpush1.msra.mxu0 0.0
          %1460 = vmatprep.subr.mxu0 0.0
          %1461 = vmatpush1.msra.mxu0 0.0
          %1462 = vmatprep.subr.mxu0 0.0
          %1463 = vmatpush1.msra.mxu0 0.0
          %1464 = vmatprep.subr.mxu0 0.0
          %1465 = vmatpush1.msra.mxu0 0.0
          %1466 = vmatprep.subr.mxu0 0.0
          %1467 = vmatpush1.msra.mxu0 0.0
          %1468 = vmatprep.subr.mxu0 0.0
          %1469 = vmatpush1.msra.mxu0 0.0
          %1470 = vmatprep.subr.mxu0 0.0
          %1471 = vmatpush1.msra.mxu0 0.0
          %1472 = vmatprep.subr.mxu0 0.0
          %1473 = vmatpush1.msra.mxu0 0.0
          %1474 = vmatprep.subr.mxu0 0.0
          %1475 = vmatpush1.msra.mxu0 0.0
          %1476 = vmatprep.subr.mxu0 0.0
          %1477 = vmatpush1.msra.mxu0 0.0
          %1478 = vmatprep.subr.mxu0 0.0
          %1479 = vmatpush1.msra.mxu0 0.0
          %1480 = vmatprep.mubr.f32.mxu0 0.0
          %v1481 = vand.u32 %v1035, 4294901760
          %1482 = vmatmul.mubr.f32.gmra.mrb[0].mxu0 %v1481
          %v1483 = vpop.f32.mrb[0].mxu0
          %v1484 = vadd.f32 %v1412, %v1483
          %v1485 = vpop.f32.mrb[0].mxu0
          %1486 = vdwg.mxu0
          %v1487 = vxor.u32 %v1484, 2147483648
          %v1488 = vmul.f32 %v1487, 1.442695
          %v1489 = vpow.pop %v1488
          %v1490 = vadd.f32 %v1489, 1.0
          %v1491 = vrcp.pop %v1490
          %v1492 = vmul.f32 1.0, %v1491
          %vm1493 = vcmask 516096
          %1494 = vst.msk [vmem:[%s203] sm:$0x1] %vm1493, %v1492
        $region44: #{tpu_custom_call.1} parent=31 // pred_fallthru
          _
        %s1495 = sand.u32 %s110, 1
        %s1496 = scalar_lea.sflag [#allocation6], %s1495
        %s1497 = sand.u32 %s110, 1
        %s1498 = scalar_lea.vmem [#allocation7], %s1497
        // Predicated region
        $region45: #{tpu_custom_call.1} parent=31 // pred_check
          %p1499 = pneg %p120
        $region46: #{tpu_custom_call.1} parent=31 // pred_check_branch
          %1501 = sbr.rel (%p1499) target = $region48
        $region47: #{tpu_custom_call.1} parent=31 // pred_region
          %s1503 = ssub.s32 16, 16
          %1504 = vsyncadd %s1496, %s1503
          %s1505 = smul.addr %s24, 16
          %s1506 = scalar_lea.hbm %s3, %s1505
          %s1508 = sshll.u32 %s1498, 4
          %s1509 = int_to_ptr.vmem [resolvable:$true] %s1508
          %1511 = dma.vmem_to_hbm [thread:$0]  %s1509, 16, %s1506, %s1496
        $region48: #{tpu_custom_call.1} parent=31 // pred_fallthru
          _
      $region32: #{tpu_custom_call.1} parent=5 // pred_fallthru
        _
      %p1512 = scmp.le.s32.totalorder 2, %s15
      // Predicated region
      $region49: #{tpu_custom_call.1} parent=5 // pred_check
        %p1513 = pneg %p1512
      $region50: #{tpu_custom_call.1} parent=5 // pred_check_branch
        %1515 = sbr.rel (%p1513) target = $region52
      $region51: #{tpu_custom_call.1} parent=5 // pred_region
        %s1516 = ssub.s32 %s15, 2
        // Predicated region
        $region53: #{tpu_custom_call.1} parent=51 // pred_check
          %p1517 = pneg %p126
        $region54: #{tpu_custom_call.1} parent=51 // pred_check_branch
          %1519 = sbr.rel (%p1517) target = $region56
        $region55: #{tpu_custom_call.1} parent=51 // pred_region
          %s1520 = sand.u32 %s111, 1
          %s1521 = scalar_lea.sflag [#allocation6], %s1520
          %s1522 = sand.u32 %s111, 1
          %s1523 = scalar_lea.vmem [#allocation7], %s1522
          %1524 = dma.done %s1521, 16
        $region56: #{tpu_custom_call.1} parent=51 // pred_fallthru
          _
      $region52: #{tpu_custom_call.1} parent=5 // pred_fallthru
        _
    $region6: #{tpu_custom_call.1} parent=1 // loop_footer
      %s19 = sadd.s32 1, %s15
    $region7: #{tpu_custom_call.1} parent=1 // loop_footer_branch
      %14 = sbr.rel target = $region3
    $region8: #{tpu_custom_call.1} parent=1 // loop_exit
      _
    %1525 = vsyncpa [#allocation5], 1
    %s1526 = scalar_lea.sflag [#allocation5], 1
    %1527 = vsyncpa %s1526, 1
    %1528 = vsyncpa [#allocation6], 1
    %s1529 = scalar_lea.sflag [#allocation6], 1
    %1530 = vsyncpa %s1529, 1

</llo_original>
